<compile_context>
chip_gen: v6e
topology: v6e:2x2x1
jax: 0.10.0
libtpu: 0.0.40
codegen_flags: <defaults>
</compile_context>

<pallas_src>
import jax
import jax.numpy as jnp
from jax.experimental import pallas as pl
from jax.experimental.pallas import tpu as pltpu

INPUT_SIZE = 7
HIDDEN_SIZE = 64
FC1_SIZE = 32
OUT_SIZE = 3


def _sigmoid(x):
    # logistic(x) == 0.5 * (tanh(x/2) + 1): one dependent EUP op per launch.
    return 0.5 * (jnp.tanh(0.5 * x) + 1.0)


def lstm_predictor_kernel(
    x_ref,      # (T, Bb, 8)   f32  features (7) + ones column
    wx_ref,     # (8, 8H)      f32  input projection into paired gate layout
                #                    (b0 / b1 folded in via the ones column)
    wbig_ref,   # (2H, 8H)     bf16 fused recurrent weights, rows [h1 | h0]
    fc1w_ref,   # (H, 32)      f32
    fc1b_ref,   # (1, 32)      f32
    fc2w_ref,   # (32, 3)      f32
    fc2b_ref,   # (1, 3)       f32
    out_ref,    # (Bb, 3)      f32
):
    T, Bb, Ipad = x_ref.shape
    H = wbig_ref.shape[0] // 2

    wbig = wbig_ref[...]

    # Hoisted input projection + biases, off the serial path: one
    # (T*Bb, 8) @ (8, 512) matmul produces, for every t, the additive term of
    # the fused gate matmul already in the paired column layout
    #   [ b1_i | xp_i(t) | b1_f | xp_f(t) | b1_o | xp_o(t) | b1_g | xp_g(t) ]
    # with xp(t) = x(t) @ wih0 + b0.
    x2d = x_ref[...].reshape(T * Bb, Ipad)
    add_all = jnp.dot(x2d, wx_ref[...], preferred_element_type=jnp.float32)

    def paired_activate(pre):
        # columns [i1 i0 | f1 f0 | o1 o0 | g1 g0]; all slices 128-lane aligned.
        sig = _sigmoid(pre[:, : 6 * H])
        g_pair = jnp.tanh(pre[:, 6 * H:])
        return sig[:, 0:2 * H], sig[:, 2 * H:4 * H], sig[:, 4 * H:6 * H], g_pair

    # ---- prologue: step-0 layer-0 cell (h0(-1) = c0(-1) = 0) ----
    a0 = add_all[0:Bb, :]
    i0 = _sigmoid(a0[:, 1 * H:2 * H])
    o0 = _sigmoid(a0[:, 5 * H:6 * H])
    g0 = jnp.tanh(a0[:, 7 * H:8 * H])
    c0 = i0 * g0
    h0 = o0 * jnp.tanh(c0)
    zeros_h = jnp.zeros((Bb, H), jnp.float32)
    # pair layout: lanes [0:H] = layer-1 (step t), lanes [H:2H] = layer-0 (step t+1)
    c_pair = jnp.concatenate([zeros_h, c0], axis=-1)   # [c1(-1)=0 | c0(0)]
    h_pair = jnp.concatenate([zeros_h, h0], axis=-1)   # [h1(-1)=0 | h0(0)]

    # ---- fused recurrence: T is small and static -> fully unrolled ----
    for t in range(T):
        # Last step's layer-0 half is dead (discarded / DCE'd after unroll).
        tnext = min(t + 1, T - 1)
        pre = jnp.dot(h_pair.astype(jnp.bfloat16), wbig,
                      preferred_element_type=jnp.float32)
        pre = pre + add_all[tnext * Bb:(tnext + 1) * Bb, :]
        i_p, f_p, o_p, g_p = paired_activate(pre)
        c_pair = f_p * c_pair + i_p * g_p          # -> [c1(t)   | c0(t+1)]
        h_pair = o_p * jnp.tanh(c_pair)            # -> [h1(t)   | h0(t+1)]

    # TODO(synk): inter-layer / head dropout (training only) omitted; this is
    # the inference forward pass where dropout is the identity.

    # ---- head: fc1 -> relu -> fc2 on h1(T-1) ----
    h1 = h_pair[:, :H]
    z = jnp.dot(h1, fc1w_ref[...], preferred_element_type=jnp.float32) + fc1b_ref[...]
    z = jnp.maximum(z, 0.0)
    y = jnp.dot(z, fc2w_ref[...], preferred_element_type=jnp.float32) + fc2b_ref[...]
    out_ref[...] = y.astype(out_ref.dtype)


def init_params(key, input_size=INPUT_SIZE, hidden_size=HIDDEN_SIZE):
    """Deterministic params mimicking PyTorch's U(-1/sqrt(H), 1/sqrt(H)) init.

    Stored in PyTorch gate order [i, f, g, o] and already transposed for
    (B, K) @ (K, N) matmuls; the wrapper repacks them for the kernel.
    """
    H = hidden_size
    k = 1.0 / jnp.sqrt(jnp.float32(H))
    keys = jax.random.split(key, 12)

    def u(k_, shape):
        return jax.random.uniform(k_, shape, jnp.float32, minval=-k, maxval=k)

    return dict(
        wih0=u(keys[0], (input_size, 4 * H)),
        whh0=u(keys[1], (H, 4 * H)),
        b0=u(keys[2], (1, 4 * H)) + u(keys[3], (1, 4 * H)),   # b_ih + b_hh
        wih1=u(keys[4], (H, 4 * H)),
        whh1=u(keys[5], (H, 4 * H)),
        b1=u(keys[6], (1, 4 * H)) + u(keys[7], (1, 4 * H)),
        fc1w=u(keys[8], (H, FC1_SIZE)),
        fc1b=u(keys[9], (1, FC1_SIZE)),
        fc2w=u(keys[10], (FC1_SIZE, OUT_SIZE)),
        fc2b=u(keys[11], (1, OUT_SIZE)),
    )


def _gate_blocks(w):
    """Split a (..., 4H) PyTorch-gate-ordered [i, f, g, o] array into blocks."""
    H = w.shape[-1] // 4
    return (w[..., 0:H], w[..., H:2 * H], w[..., 2 * H:3 * H], w[..., 3 * H:4 * H])


def _pack_weights(params, input_pad):
    """Build the fused kernel weights from PyTorch-layout params.

    Paired gate-column layout (8 blocks of H columns):
        [ i1 | i0 | f1 | f0 | o1 | o0 | g1 | g0 ]
    "1" blocks are layer-1 gates of step t, "0" blocks are layer-0 gates of
    step t+1.  W_big rows: [0:H] multiply h1(t-1), [H:2H] multiply h0(t).
    """
    H = HIDDEN_SIZE
    I = params["wih0"].shape[0]

    i0w, f0w, g0w, o0w = _gate_blocks(params["wih0"])    # (I, H)
    i0r, f0r, g0r, o0r = _gate_blocks(params["whh0"])    # (H, H)
    i1x, f1x, g1x, o1x = _gate_blocks(params["wih1"])    # (H, H)  (input = h0)
    i1r, f1r, g1r, o1r = _gate_blocks(params["whh1"])    # (H, H)
    b0i, b0f, b0g, b0o = _gate_blocks(params["b0"])      # (1, H)
    b1i, b1f, b1g, b1o = _gate_blocks(params["b1"])      # (1, H)

    zf = jnp.zeros((I, H), jnp.float32)
    zh = jnp.zeros((H, H), jnp.float32)

    # wx: (I+1, 8H) — feature rows + ones(bias) row, already in paired layout.
    wx_cols = []
    for (b1g_, w0g_, b0g_) in ((b1i, i0w, b0i), (b1f, f0w, b0f),
                               (b1o, o0w, b0o), (b1g, g0w, b0g)):
        wx_cols.append(jnp.concatenate([zf, b1g_], axis=0))       # layer-1: only b1
        wx_cols.append(jnp.concatenate([w0g_, b0g_], axis=0))     # layer-0: wih0 + b0
    wx = jnp.concatenate(wx_cols, axis=1)                         # (I+1, 8H)
    if wx.shape[0] < input_pad:
        wx = jnp.pad(wx, ((0, input_pad - wx.shape[0]), (0, 0)))

    # W_big: (2H, 8H) bf16, rows [h1 | h0].
    big_cols = []
    for (w1r_, w1x_, w0r_) in ((i1r, i1x, i0r), (f1r, f1x, f0r),
                               (o1r, o1x, o0r), (g1r, g1x, g0r)):
        big_cols.append(jnp.concatenate([w1r_, w1x_], axis=0))    # layer-1 gate block
        big_cols.append(jnp.concatenate([zh, w0r_], axis=0))      # layer-0 gate block
    wbig = jnp.concatenate(big_cols, axis=1).astype(jnp.bfloat16)  # (2H, 8H)

    return wx, wbig


def _round_up(v, m):
    return ((v + m - 1) // m) * m


def _pick_block_b(B):
    if B < 16:
        return _round_up(B, 8)                     # single grid program
    # >= 2 programs so the "parallel" batch axis shards across both v7x
    # TensorCores; capped at 64 rows for vreg pressure at large B.
    return min(64, _round_up(-(-B // 2), 8))


@jax.jit
def lstm_predictor(x, params):
    """x: (B, T, I) float32, batch_first like the PyTorch module (inference)."""
    B, T, I = x.shape
    input_pad = _round_up(I + 1, 8)        # features + ones column (7+1 = 8)

    wx, wbig = _pack_weights(params, input_pad)

    block_b = _pick_block_b(B)
    b_pad = pl.cdiv(B, block_b) * block_b

    # (T, B, I) with a ones column (folds biases into wx), feature/batch padded.
    x_tbi = jnp.transpose(x, (1, 0, 2)).astype(jnp.float32)
    x_aug = jnp.concatenate([x_tbi, jnp.ones((T, B, 1), jnp.float32)], axis=-1)
    if input_pad > I + 1:
        x_aug = jnp.pad(x_aug, ((0, 0), (0, 0), (0, input_pad - (I + 1))))
    if b_pad != B:
        x_aug = jnp.pad(x_aug, ((0, 0), (0, b_pad - B), (0, 0)))

    def full_spec(a):
        n = a.ndim
        return pl.BlockSpec(a.shape, lambda b: (0,) * n)   # whole array every step

    weights = (wx, wbig, params["fc1w"], params["fc1b"],
               params["fc2w"], params["fc2b"])

    out = pl.pallas_call(
        lstm_predictor_kernel,
        out_shape=jax.ShapeDtypeStruct((b_pad, OUT_SIZE), jnp.float32),
        grid=(b_pad // block_b,),
        in_specs=[pl.BlockSpec((T, block_b, input_pad), lambda b: (0, b, 0))]
                 + [full_spec(w) for w in weights],
        # (block_b, 3) output is lane-sparse; per review this is a
        # trace-confirmed micro-opt only, so left as-is.
        out_specs=pl.BlockSpec((block_b, OUT_SIZE), lambda b: (b, 0)),
        compiler_params=pltpu.CompilerParams(dimension_semantics=("parallel",)),
    )(x_aug, *weights)
    return out[:B]


def _reference(x, params, recurrent_dtype=jnp.float32):
    """Pure-JAX reference in the original PyTorch layout.

    recurrent_dtype=bfloat16 emulates the kernel's MXU operand precision on
    the h @ W terms (f32 accumulation; everything else stays f32).
    """
    B, T, I = x.shape
    H = HIDDEN_SIZE

    def rdot(h, w):
        return jnp.dot(h.astype(recurrent_dtype), w.astype(recurrent_dtype),
                       preferred_element_type=jnp.float32)

    def cell(x_proj, h, c, whh):
        g = x_proj + rdot(h, whh)
        i = jax.nn.sigmoid(g[:, 0 * H:1 * H])
        f = jax.nn.sigmoid(g[:, 1 * H:2 * H])
        gg = jnp.tanh(g[:, 2 * H:3 * H])
        o = jax.nn.sigmoid(g[:, 3 * H:4 * H])
        c = f * c + i * gg
        return o * jnp.tanh(c), c

    h0 = c0 = h1 = c1 = jnp.zeros((B, H), jnp.float32)
    for t in range(T):
        h0, c0 = cell(x[:, t, :] @ params["wih0"] + params["b0"],
                      h0, c0, params["whh0"])
        h1, c1 = cell(rdot(h0, params["wih1"]) + params["b1"],
                      h1, c1, params["whh1"])
    z = jnp.maximum(h1 @ params["fc1w"] + params["fc1b"], 0.0)
    return z @ params["fc2w"] + params["fc2b"]


if __name__ == "__main__":
    key = jax.random.PRNGKey(0)
    k_x, k_p = jax.random.split(key)

    B, T, I = 2, 8, INPUT_SIZE
    x = jax.random.normal(k_x, (B, T, I), dtype=jnp.float32)
    params = init_params(k_p)

    out = jax.block_until_ready(lstm_predictor(x, params))
    assert out.shape == (B, OUT_SIZE), out.shape

    # Tight check vs. a reference that emulates the kernel's bf16 MXU operands
    # (validates the fused / paired weight packing and recurrence wiring).
    ref_bf16 = _reference(x, params, recurrent_dtype=jnp.bfloat16)
    assert jnp.allclose(out, ref_bf16, atol=2e-3, rtol=2e-3), (out, ref_bf16)

    # Looser check vs. the full-f32 PyTorch-semantics reference; the only
    # deviation is bf16 rounding of the recurrent matmul operands.
    ref_f32 = _reference(x, params)
    assert jnp.allclose(out, ref_f32, atol=1e-2, rtol=1e-2), (out, ref_f32)

    print("KERNEL_OK")
</pallas_src>

<mosaic_0001>
module attributes {stable_mosaic.version = 11 : i64} {
  func.func @lstm_predictor_kernel(%arg0: i32, %arg1: memref<8x8x8xf32, #tpu.memory_space<vmem>>, %arg2: memref<8x512xf32, #tpu.memory_space<vmem>>, %arg3: memref<128x512xbf16, #tpu.memory_space<vmem>>, %arg4: memref<64x32xf32, #tpu.memory_space<vmem>>, %arg5: memref<1x32xf32, #tpu.memory_space<vmem>>, %arg6: memref<32x3xf32, #tpu.memory_space<vmem>>, %arg7: memref<1x3xf32, #tpu.memory_space<vmem>>, %arg8: memref<8x3xf32, #tpu.memory_space<vmem>>) attributes {dimension_semantics = [#tpu.dimension_semantics<parallel>], iteration_bounds = array<i64: 1>, scalar_prefetch = 0 : i64, scratch_operands = 0 : i64, tpu.core_type = #tpu.core_type<tc>, window_params = [{transform_indices = @transform_0, window_bounds = array<i64: 8, 8, 8>}, {pipeline_mode = #tpu.pipeline_mode<synchronous>, transform_indices = @transform_1, window_bounds = array<i64: 8, 512>}, {pipeline_mode = #tpu.pipeline_mode<synchronous>, transform_indices = @transform_2, window_bounds = array<i64: 128, 512>}, {pipeline_mode = #tpu.pipeline_mode<synchronous>, transform_indices = @transform_3, window_bounds = array<i64: 64, 32>}, {pipeline_mode = #tpu.pipeline_mode<synchronous>, transform_indices = @transform_4, window_bounds = array<i64: 1, 32>}, {pipeline_mode = #tpu.pipeline_mode<synchronous>, transform_indices = @transform_5, window_bounds = array<i64: 32, 3>}, {pipeline_mode = #tpu.pipeline_mode<synchronous>, transform_indices = @transform_6, window_bounds = array<i64: 1, 3>}, {transform_indices = @transform_7, window_bounds = array<i64: 8, 3>}]} {
    %c0 = arith.constant 0 : index
    %c0_0 = arith.constant 0 : index
    %0 = vector.load %arg3[%c0, %c0_0] : memref<128x512xbf16, #tpu.memory_space<vmem>>, vector<128x512xbf16>
    %c0_1 = arith.constant 0 : index
    %c0_2 = arith.constant 0 : index
    %c0_3 = arith.constant 0 : index
    %1 = vector.load %arg1[%c0_1, %c0_2, %c0_3] : memref<8x8x8xf32, #tpu.memory_space<vmem>>, vector<8x8x8xf32>
    %2 = vector.shape_cast %1 : vector<8x8x8xf32> to vector<64x8xf32>
    %c0_4 = arith.constant 0 : index
    %c0_5 = arith.constant 0 : index
    %3 = vector.load %arg2[%c0_4, %c0_5] : memref<8x512xf32, #tpu.memory_space<vmem>>, vector<8x512xf32>
    %cst = arith.constant dense<0.000000e+00> : vector<64x512xf32>
    %4 = tpu.matmul %2, %3, %cst {dimension_numbers = #tpu.dot_dimension_numbers<[1], [0], [0], [1], [0, 0, 1, 1], [], []>} : vector<64x8xf32>, vector<8x512xf32>, vector<64x512xf32> -> vector<64x512xf32>
    %5 = vector.extract_strided_slice %4 {offsets = [0, 0], sizes = [8, 512], strides = [1, 1]} : vector<64x512xf32> to vector<8x512xf32>
    %6 = vector.extract_strided_slice %5 {offsets = [0, 64], sizes = [8, 64], strides = [1, 1]} : vector<8x512xf32> to vector<8x64xf32>
    %cst_6 = arith.constant 5.000000e-01 : f32
    %7 = vector.broadcast %cst_6 : f32 to vector<8x64xf32>
    %8 = arith.mulf %7, %6 : vector<8x64xf32>
    %9 = math.tanh %8 : vector<8x64xf32>
    %cst_7 = arith.constant 1.000000e+00 : f32
    %10 = vector.broadcast %cst_7 : f32 to vector<8x64xf32>
    %11 = arith.addf %9, %10 : vector<8x64xf32>
    %cst_8 = arith.constant 5.000000e-01 : f32
    %12 = vector.broadcast %cst_8 : f32 to vector<8x64xf32>
    %13 = arith.mulf %12, %11 : vector<8x64xf32>
    %14 = vector.extract_strided_slice %5 {offsets = [0, 320], sizes = [8, 64], strides = [1, 1]} : vector<8x512xf32> to vector<8x64xf32>
    %cst_9 = arith.constant 5.000000e-01 : f32
    %15 = vector.broadcast %cst_9 : f32 to vector<8x64xf32>
    %16 = arith.mulf %15, %14 : vector<8x64xf32>
    %17 = math.tanh %16 : vector<8x64xf32>
    %cst_10 = arith.constant 1.000000e+00 : f32
    %18 = vector.broadcast %cst_10 : f32 to vector<8x64xf32>
    %19 = arith.addf %17, %18 : vector<8x64xf32>
    %cst_11 = arith.constant 5.000000e-01 : f32
    %20 = vector.broadcast %cst_11 : f32 to vector<8x64xf32>
    %21 = arith.mulf %20, %19 : vector<8x64xf32>
    %22 = vector.extract_strided_slice %5 {offsets = [0, 448], sizes = [8, 64], strides = [1, 1]} : vector<8x512xf32> to vector<8x64xf32>
    %23 = math.tanh %22 : vector<8x64xf32>
    %24 = arith.mulf %13, %23 : vector<8x64xf32>
    %25 = math.tanh %24 : vector<8x64xf32>
    %26 = arith.mulf %21, %25 : vector<8x64xf32>
    %cst_12 = arith.constant 0.000000e+00 : f32
    %27 = vector.broadcast %cst_12 : f32 to vector<8x64xf32>
    %28 = tpu.concatenate %27, %24 in 1 : vector<8x64xf32>, vector<8x64xf32> -> vector<8x128xf32>
    %29 = tpu.concatenate %27, %26 in 1 : vector<8x64xf32>, vector<8x64xf32> -> vector<8x128xf32>
    %30 = arith.truncf %29 : vector<8x128xf32> to vector<8x128xbf16>
    %cst_13 = arith.constant dense<0.000000e+00> : vector<8x512xf32>
    %31 = tpu.matmul %30, %0, %cst_13 {dimension_numbers = #tpu.dot_dimension_numbers<[1], [0], [0], [1], [0, 0, 1, 1], [], []>} : vector<8x128xbf16>, vector<128x512xbf16>, vector<8x512xf32> -> vector<8x512xf32>
    %32 = vector.extract_strided_slice %4 {offsets = [8, 0], sizes = [8, 512], strides = [1, 1]} : vector<64x512xf32> to vector<8x512xf32>
    %33 = arith.addf %31, %32 : vector<8x512xf32>
    %34 = vector.extract_strided_slice %33 {offsets = [0, 0], sizes = [8, 384], strides = [1, 1]} : vector<8x512xf32> to vector<8x384xf32>
    %cst_14 = arith.constant 5.000000e-01 : f32
    %35 = vector.broadcast %cst_14 : f32 to vector<8x384xf32>
    %36 = arith.mulf %35, %34 : vector<8x384xf32>
    %37 = math.tanh %36 : vector<8x384xf32>
    %cst_15 = arith.constant 1.000000e+00 : f32
    %38 = vector.broadcast %cst_15 : f32 to vector<8x384xf32>
    %39 = arith.addf %37, %38 : vector<8x384xf32>
    %cst_16 = arith.constant 5.000000e-01 : f32
    %40 = vector.broadcast %cst_16 : f32 to vector<8x384xf32>
    %41 = arith.mulf %40, %39 : vector<8x384xf32>
    %42 = vector.extract_strided_slice %33 {offsets = [0, 384], sizes = [8, 128], strides = [1, 1]} : vector<8x512xf32> to vector<8x128xf32>
    %43 = math.tanh %42 : vector<8x128xf32>
    %44 = vector.extract_strided_slice %41 {offsets = [0, 0], sizes = [8, 128], strides = [1, 1]} : vector<8x384xf32> to vector<8x128xf32>
    %45 = vector.extract_strided_slice %41 {offsets = [0, 128], sizes = [8, 128], strides = [1, 1]} : vector<8x384xf32> to vector<8x128xf32>
    %46 = vector.extract_strided_slice %41 {offsets = [0, 256], sizes = [8, 128], strides = [1, 1]} : vector<8x384xf32> to vector<8x128xf32>
    %47 = arith.mulf %45, %28 : vector<8x128xf32>
    %48 = arith.mulf %44, %43 : vector<8x128xf32>
    %49 = arith.addf %47, %48 : vector<8x128xf32>
    %50 = math.tanh %49 : vector<8x128xf32>
    %51 = arith.mulf %46, %50 : vector<8x128xf32>
    %52 = arith.truncf %51 : vector<8x128xf32> to vector<8x128xbf16>
    %cst_17 = arith.constant dense<0.000000e+00> : vector<8x512xf32>
    %53 = tpu.matmul %52, %0, %cst_17 {dimension_numbers = #tpu.dot_dimension_numbers<[1], [0], [0], [1], [0, 0, 1, 1], [], []>} : vector<8x128xbf16>, vector<128x512xbf16>, vector<8x512xf32> -> vector<8x512xf32>
    %54 = vector.extract_strided_slice %4 {offsets = [16, 0], sizes = [8, 512], strides = [1, 1]} : vector<64x512xf32> to vector<8x512xf32>
    %55 = arith.addf %53, %54 : vector<8x512xf32>
    %56 = vector.extract_strided_slice %55 {offsets = [0, 0], sizes = [8, 384], strides = [1, 1]} : vector<8x512xf32> to vector<8x384xf32>
    %cst_18 = arith.constant 5.000000e-01 : f32
    %57 = vector.broadcast %cst_18 : f32 to vector<8x384xf32>
    %58 = arith.mulf %57, %56 : vector<8x384xf32>
    %59 = math.tanh %58 : vector<8x384xf32>
    %cst_19 = arith.constant 1.000000e+00 : f32
    %60 = vector.broadcast %cst_19 : f32 to vector<8x384xf32>
    %61 = arith.addf %59, %60 : vector<8x384xf32>
    %cst_20 = arith.constant 5.000000e-01 : f32
    %62 = vector.broadcast %cst_20 : f32 to vector<8x384xf32>
    %63 = arith.mulf %62, %61 : vector<8x384xf32>
    %64 = vector.extract_strided_slice %55 {offsets = [0, 384], sizes = [8, 128], strides = [1, 1]} : vector<8x512xf32> to vector<8x128xf32>
    %65 = math.tanh %64 : vector<8x128xf32>
    %66 = vector.extract_strided_slice %63 {offsets = [0, 0], sizes = [8, 128], strides = [1, 1]} : vector<8x384xf32> to vector<8x128xf32>
    %67 = vector.extract_strided_slice %63 {offsets = [0, 128], sizes = [8, 128], strides = [1, 1]} : vector<8x384xf32> to vector<8x128xf32>
    %68 = vector.extract_strided_slice %63 {offsets = [0, 256], sizes = [8, 128], strides = [1, 1]} : vector<8x384xf32> to vector<8x128xf32>
    %69 = arith.mulf %67, %49 : vector<8x128xf32>
    %70 = arith.mulf %66, %65 : vector<8x128xf32>
    %71 = arith.addf %69, %70 : vector<8x128xf32>
    %72 = math.tanh %71 : vector<8x128xf32>
    %73 = arith.mulf %68, %72 : vector<8x128xf32>
    %74 = arith.truncf %73 : vector<8x128xf32> to vector<8x128xbf16>
    %cst_21 = arith.constant dense<0.000000e+00> : vector<8x512xf32>
    %75 = tpu.matmul %74, %0, %cst_21 {dimension_numbers = #tpu.dot_dimension_numbers<[1], [0], [0], [1], [0, 0, 1, 1], [], []>} : vector<8x128xbf16>, vector<128x512xbf16>, vector<8x512xf32> -> vector<8x512xf32>
    %76 = vector.extract_strided_slice %4 {offsets = [24, 0], sizes = [8, 512], strides = [1, 1]} : vector<64x512xf32> to vector<8x512xf32>
    %77 = arith.addf %75, %76 : vector<8x512xf32>
    %78 = vector.extract_strided_slice %77 {offsets = [0, 0], sizes = [8, 384], strides = [1, 1]} : vector<8x512xf32> to vector<8x384xf32>
    %cst_22 = arith.constant 5.000000e-01 : f32
    %79 = vector.broadcast %cst_22 : f32 to vector<8x384xf32>
    %80 = arith.mulf %79, %78 : vector<8x384xf32>
    %81 = math.tanh %80 : vector<8x384xf32>
    %cst_23 = arith.constant 1.000000e+00 : f32
    %82 = vector.broadcast %cst_23 : f32 to vector<8x384xf32>
    %83 = arith.addf %81, %82 : vector<8x384xf32>
    %cst_24 = arith.constant 5.000000e-01 : f32
    %84 = vector.broadcast %cst_24 : f32 to vector<8x384xf32>
    %85 = arith.mulf %84, %83 : vector<8x384xf32>
    %86 = vector.extract_strided_slice %77 {offsets = [0, 384], sizes = [8, 128], strides = [1, 1]} : vector<8x512xf32> to vector<8x128xf32>
    %87 = math.tanh %86 : vector<8x128xf32>
    %88 = vector.extract_strided_slice %85 {offsets = [0, 0], sizes = [8, 128], strides = [1, 1]} : vector<8x384xf32> to vector<8x128xf32>
    %89 = vector.extract_strided_slice %85 {offsets = [0, 128], sizes = [8, 128], strides = [1, 1]} : vector<8x384xf32> to vector<8x128xf32>
    %90 = vector.extract_strided_slice %85 {offsets = [0, 256], sizes = [8, 128], strides = [1, 1]} : vector<8x384xf32> to vector<8x128xf32>
    %91 = arith.mulf %89, %71 : vector<8x128xf32>
    %92 = arith.mulf %88, %87 : vector<8x128xf32>
    %93 = arith.addf %91, %92 : vector<8x128xf32>
    %94 = math.tanh %93 : vector<8x128xf32>
    %95 = arith.mulf %90, %94 : vector<8x128xf32>
    %96 = arith.truncf %95 : vector<8x128xf32> to vector<8x128xbf16>
    %cst_25 = arith.constant dense<0.000000e+00> : vector<8x512xf32>
    %97 = tpu.matmul %96, %0, %cst_25 {dimension_numbers = #tpu.dot_dimension_numbers<[1], [0], [0], [1], [0, 0, 1, 1], [], []>} : vector<8x128xbf16>, vector<128x512xbf16>, vector<8x512xf32> -> vector<8x512xf32>
    %98 = vector.extract_strided_slice %4 {offsets = [32, 0], sizes = [8, 512], strides = [1, 1]} : vector<64x512xf32> to vector<8x512xf32>
    %99 = arith.addf %97, %98 : vector<8x512xf32>
    %100 = vector.extract_strided_slice %99 {offsets = [0, 0], sizes = [8, 384], strides = [1, 1]} : vector<8x512xf32> to vector<8x384xf32>
    %cst_26 = arith.constant 5.000000e-01 : f32
    %101 = vector.broadcast %cst_26 : f32 to vector<8x384xf32>
    %102 = arith.mulf %101, %100 : vector<8x384xf32>
    %103 = math.tanh %102 : vector<8x384xf32>
    %cst_27 = arith.constant 1.000000e+00 : f32
    %104 = vector.broadcast %cst_27 : f32 to vector<8x384xf32>
    %105 = arith.addf %103, %104 : vector<8x384xf32>
    %cst_28 = arith.constant 5.000000e-01 : f32
    %106 = vector.broadcast %cst_28 : f32 to vector<8x384xf32>
    %107 = arith.mulf %106, %105 : vector<8x384xf32>
    %108 = vector.extract_strided_slice %99 {offsets = [0, 384], sizes = [8, 128], strides = [1, 1]} : vector<8x512xf32> to vector<8x128xf32>
    %109 = math.tanh %108 : vector<8x128xf32>
    %110 = vector.extract_strided_slice %107 {offsets = [0, 0], sizes = [8, 128], strides = [1, 1]} : vector<8x384xf32> to vector<8x128xf32>
    %111 = vector.extract_strided_slice %107 {offsets = [0, 128], sizes = [8, 128], strides = [1, 1]} : vector<8x384xf32> to vector<8x128xf32>
    %112 = vector.extract_strided_slice %107 {offsets = [0, 256], sizes = [8, 128], strides = [1, 1]} : vector<8x384xf32> to vector<8x128xf32>
    %113 = arith.mulf %111, %93 : vector<8x128xf32>
    %114 = arith.mulf %110, %109 : vector<8x128xf32>
    %115 = arith.addf %113, %114 : vector<8x128xf32>
    %116 = math.tanh %115 : vector<8x128xf32>
    %117 = arith.mulf %112, %116 : vector<8x128xf32>
    %118 = arith.truncf %117 : vector<8x128xf32> to vector<8x128xbf16>
    %cst_29 = arith.constant dense<0.000000e+00> : vector<8x512xf32>
    %119 = tpu.matmul %118, %0, %cst_29 {dimension_numbers = #tpu.dot_dimension_numbers<[1], [0], [0], [1], [0, 0, 1, 1], [], []>} : vector<8x128xbf16>, vector<128x512xbf16>, vector<8x512xf32> -> vector<8x512xf32>
    %120 = vector.extract_strided_slice %4 {offsets = [40, 0], sizes = [8, 512], strides = [1, 1]} : vector<64x512xf32> to vector<8x512xf32>
    %121 = arith.addf %119, %120 : vector<8x512xf32>
    %122 = vector.extract_strided_slice %121 {offsets = [0, 0], sizes = [8, 384], strides = [1, 1]} : vector<8x512xf32> to vector<8x384xf32>
    %cst_30 = arith.constant 5.000000e-01 : f32
    %123 = vector.broadcast %cst_30 : f32 to vector<8x384xf32>
    %124 = arith.mulf %123, %122 : vector<8x384xf32>
    %125 = math.tanh %124 : vector<8x384xf32>
    %cst_31 = arith.constant 1.000000e+00 : f32
    %126 = vector.broadcast %cst_31 : f32 to vector<8x384xf32>
    %127 = arith.addf %125, %126 : vector<8x384xf32>
    %cst_32 = arith.constant 5.000000e-01 : f32
    %128 = vector.broadcast %cst_32 : f32 to vector<8x384xf32>
    %129 = arith.mulf %128, %127 : vector<8x384xf32>
    %130 = vector.extract_strided_slice %121 {offsets = [0, 384], sizes = [8, 128], strides = [1, 1]} : vector<8x512xf32> to vector<8x128xf32>
    %131 = math.tanh %130 : vector<8x128xf32>
    %132 = vector.extract_strided_slice %129 {offsets = [0, 0], sizes = [8, 128], strides = [1, 1]} : vector<8x384xf32> to vector<8x128xf32>
    %133 = vector.extract_strided_slice %129 {offsets = [0, 128], sizes = [8, 128], strides = [1, 1]} : vector<8x384xf32> to vector<8x128xf32>
    %134 = vector.extract_strided_slice %129 {offsets = [0, 256], sizes = [8, 128], strides = [1, 1]} : vector<8x384xf32> to vector<8x128xf32>
    %135 = arith.mulf %133, %115 : vector<8x128xf32>
    %136 = arith.mulf %132, %131 : vector<8x128xf32>
    %137 = arith.addf %135, %136 : vector<8x128xf32>
    %138 = math.tanh %137 : vector<8x128xf32>
    %139 = arith.mulf %134, %138 : vector<8x128xf32>
    %140 = arith.truncf %139 : vector<8x128xf32> to vector<8x128xbf16>
    %cst_33 = arith.constant dense<0.000000e+00> : vector<8x512xf32>
    %141 = tpu.matmul %140, %0, %cst_33 {dimension_numbers = #tpu.dot_dimension_numbers<[1], [0], [0], [1], [0, 0, 1, 1], [], []>} : vector<8x128xbf16>, vector<128x512xbf16>, vector<8x512xf32> -> vector<8x512xf32>
    %142 = vector.extract_strided_slice %4 {offsets = [48, 0], sizes = [8, 512], strides = [1, 1]} : vector<64x512xf32> to vector<8x512xf32>
    %143 = arith.addf %141, %142 : vector<8x512xf32>
    %144 = vector.extract_strided_slice %143 {offsets = [0, 0], sizes = [8, 384], strides = [1, 1]} : vector<8x512xf32> to vector<8x384xf32>
    %cst_34 = arith.constant 5.000000e-01 : f32
    %145 = vector.broadcast %cst_34 : f32 to vector<8x384xf32>
    %146 = arith.mulf %145, %144 : vector<8x384xf32>
    %147 = math.tanh %146 : vector<8x384xf32>
    %cst_35 = arith.constant 1.000000e+00 : f32
    %148 = vector.broadcast %cst_35 : f32 to vector<8x384xf32>
    %149 = arith.addf %147, %148 : vector<8x384xf32>
    %cst_36 = arith.constant 5.000000e-01 : f32
    %150 = vector.broadcast %cst_36 : f32 to vector<8x384xf32>
    %151 = arith.mulf %150, %149 : vector<8x384xf32>
    %152 = vector.extract_strided_slice %143 {offsets = [0, 384], sizes = [8, 128], strides = [1, 1]} : vector<8x512xf32> to vector<8x128xf32>
    %153 = math.tanh %152 : vector<8x128xf32>
    %154 = vector.extract_strided_slice %151 {offsets = [0, 0], sizes = [8, 128], strides = [1, 1]} : vector<8x384xf32> to vector<8x128xf32>
    %155 = vector.extract_strided_slice %151 {offsets = [0, 128], sizes = [8, 128], strides = [1, 1]} : vector<8x384xf32> to vector<8x128xf32>
    %156 = vector.extract_strided_slice %151 {offsets = [0, 256], sizes = [8, 128], strides = [1, 1]} : vector<8x384xf32> to vector<8x128xf32>
    %157 = arith.mulf %155, %137 : vector<8x128xf32>
    %158 = arith.mulf %154, %153 : vector<8x128xf32>
    %159 = arith.addf %157, %158 : vector<8x128xf32>
    %160 = math.tanh %159 : vector<8x128xf32>
    %161 = arith.mulf %156, %160 : vector<8x128xf32>
    %162 = arith.truncf %161 : vector<8x128xf32> to vector<8x128xbf16>
    %cst_37 = arith.constant dense<0.000000e+00> : vector<8x512xf32>
    %163 = tpu.matmul %162, %0, %cst_37 {dimension_numbers = #tpu.dot_dimension_numbers<[1], [0], [0], [1], [0, 0, 1, 1], [], []>} : vector<8x128xbf16>, vector<128x512xbf16>, vector<8x512xf32> -> vector<8x512xf32>
    %164 = vector.extract_strided_slice %4 {offsets = [56, 0], sizes = [8, 512], strides = [1, 1]} : vector<64x512xf32> to vector<8x512xf32>
    %165 = arith.addf %163, %164 : vector<8x512xf32>
    %166 = vector.extract_strided_slice %165 {offsets = [0, 0], sizes = [8, 384], strides = [1, 1]} : vector<8x512xf32> to vector<8x384xf32>
    %cst_38 = arith.constant 5.000000e-01 : f32
    %167 = vector.broadcast %cst_38 : f32 to vector<8x384xf32>
    %168 = arith.mulf %167, %166 : vector<8x384xf32>
    %169 = math.tanh %168 : vector<8x384xf32>
    %cst_39 = arith.constant 1.000000e+00 : f32
    %170 = vector.broadcast %cst_39 : f32 to vector<8x384xf32>
    %171 = arith.addf %169, %170 : vector<8x384xf32>
    %cst_40 = arith.constant 5.000000e-01 : f32
    %172 = vector.broadcast %cst_40 : f32 to vector<8x384xf32>
    %173 = arith.mulf %172, %171 : vector<8x384xf32>
    %174 = vector.extract_strided_slice %165 {offsets = [0, 384], sizes = [8, 128], strides = [1, 1]} : vector<8x512xf32> to vector<8x128xf32>
    %175 = math.tanh %174 : vector<8x128xf32>
    %176 = vector.extract_strided_slice %173 {offsets = [0, 0], sizes = [8, 128], strides = [1, 1]} : vector<8x384xf32> to vector<8x128xf32>
    %177 = vector.extract_strided_slice %173 {offsets = [0, 128], sizes = [8, 128], strides = [1, 1]} : vector<8x384xf32> to vector<8x128xf32>
    %178 = vector.extract_strided_slice %173 {offsets = [0, 256], sizes = [8, 128], strides = [1, 1]} : vector<8x384xf32> to vector<8x128xf32>
    %179 = arith.mulf %177, %159 : vector<8x128xf32>
    %180 = arith.mulf %176, %175 : vector<8x128xf32>
    %181 = arith.addf %179, %180 : vector<8x128xf32>
    %182 = math.tanh %181 : vector<8x128xf32>
    %183 = arith.mulf %178, %182 : vector<8x128xf32>
    %184 = arith.truncf %183 : vector<8x128xf32> to vector<8x128xbf16>
    %cst_41 = arith.constant dense<0.000000e+00> : vector<8x512xf32>
    %185 = tpu.matmul %184, %0, %cst_41 {dimension_numbers = #tpu.dot_dimension_numbers<[1], [0], [0], [1], [0, 0, 1, 1], [], []>} : vector<8x128xbf16>, vector<128x512xbf16>, vector<8x512xf32> -> vector<8x512xf32>
    %186 = vector.extract_strided_slice %4 {offsets = [56, 0], sizes = [8, 512], strides = [1, 1]} : vector<64x512xf32> to vector<8x512xf32>
    %187 = arith.addf %185, %186 : vector<8x512xf32>
    %188 = vector.extract_strided_slice %187 {offsets = [0, 0], sizes = [8, 384], strides = [1, 1]} : vector<8x512xf32> to vector<8x384xf32>
    %cst_42 = arith.constant 5.000000e-01 : f32
    %189 = vector.broadcast %cst_42 : f32 to vector<8x384xf32>
    %190 = arith.mulf %189, %188 : vector<8x384xf32>
    %191 = math.tanh %190 : vector<8x384xf32>
    %cst_43 = arith.constant 1.000000e+00 : f32
    %192 = vector.broadcast %cst_43 : f32 to vector<8x384xf32>
    %193 = arith.addf %191, %192 : vector<8x384xf32>
    %cst_44 = arith.constant 5.000000e-01 : f32
    %194 = vector.broadcast %cst_44 : f32 to vector<8x384xf32>
    %195 = arith.mulf %194, %193 : vector<8x384xf32>
    %196 = vector.extract_strided_slice %187 {offsets = [0, 384], sizes = [8, 128], strides = [1, 1]} : vector<8x512xf32> to vector<8x128xf32>
    %197 = math.tanh %196 : vector<8x128xf32>
    %198 = vector.extract_strided_slice %195 {offsets = [0, 0], sizes = [8, 128], strides = [1, 1]} : vector<8x384xf32> to vector<8x128xf32>
    %199 = vector.extract_strided_slice %195 {offsets = [0, 128], sizes = [8, 128], strides = [1, 1]} : vector<8x384xf32> to vector<8x128xf32>
    %200 = vector.extract_strided_slice %195 {offsets = [0, 256], sizes = [8, 128], strides = [1, 1]} : vector<8x384xf32> to vector<8x128xf32>
    %201 = arith.mulf %199, %181 : vector<8x128xf32>
    %202 = arith.mulf %198, %197 : vector<8x128xf32>
    %203 = arith.addf %201, %202 : vector<8x128xf32>
    %204 = math.tanh %203 : vector<8x128xf32>
    %205 = arith.mulf %200, %204 : vector<8x128xf32>
    %206 = vector.extract_strided_slice %205 {offsets = [0, 0], sizes = [8, 64], strides = [1, 1]} : vector<8x128xf32> to vector<8x64xf32>
    %c0_45 = arith.constant 0 : index
    %c0_46 = arith.constant 0 : index
    %207 = vector.load %arg4[%c0_45, %c0_46] : memref<64x32xf32, #tpu.memory_space<vmem>>, vector<64x32xf32>
    %cst_47 = arith.constant dense<0.000000e+00> : vector<8x32xf32>
    %208 = tpu.matmul %206, %207, %cst_47 {dimension_numbers = #tpu.dot_dimension_numbers<[1], [0], [0], [1], [0, 0, 1, 1], [], []>} : vector<8x64xf32>, vector<64x32xf32>, vector<8x32xf32> -> vector<8x32xf32>
    %c0_48 = arith.constant 0 : index
    %c0_49 = arith.constant 0 : index
    %209 = vector.load %arg5[%c0_48, %c0_49] : memref<1x32xf32, #tpu.memory_space<vmem>>, vector<1x32xf32>
    %210 = vector.broadcast %209 : vector<1x32xf32> to vector<8x32xf32>
    %211 = arith.addf %208, %210 : vector<8x32xf32>
    %cst_50 = arith.constant 0.000000e+00 : f32
    %212 = vector.broadcast %cst_50 : f32 to vector<8x32xf32>
    %213 = arith.maximumf %211, %212 : vector<8x32xf32>
    %c0_51 = arith.constant 0 : index
    %c0_52 = arith.constant 0 : index
    %214 = vector.load %arg6[%c0_51, %c0_52] : memref<32x3xf32, #tpu.memory_space<vmem>>, vector<32x3xf32>
    %cst_53 = arith.constant dense<0.000000e+00> : vector<8x3xf32>
    %215 = tpu.matmul %213, %214, %cst_53 {dimension_numbers = #tpu.dot_dimension_numbers<[1], [0], [0], [1], [0, 0, 1, 1], [], []>} : vector<8x32xf32>, vector<32x3xf32>, vector<8x3xf32> -> vector<8x3xf32>
    %c0_54 = arith.constant 0 : index
    %c0_55 = arith.constant 0 : index
    %216 = vector.load %arg7[%c0_54, %c0_55] : memref<1x3xf32, #tpu.memory_space<vmem>>, vector<1x3xf32>
    %217 = vector.broadcast %216 : vector<1x3xf32> to vector<8x3xf32>
    %218 = arith.addf %215, %217 : vector<8x3xf32>
    %c0_56 = arith.constant 0 : index
    %c0_57 = arith.constant 0 : index
    %219 = vector.load %arg8[%c0_56, %c0_57] : memref<8x3xf32, #tpu.memory_space<vmem>>, vector<8x3xf32>
    tpu.vector_store %arg8[%c0_56, %c0_57], %218 {strides = array<i32>} : memref<8x3xf32, #tpu.memory_space<vmem>>, vector<8x3xf32>,
    return
  }
  func.func @transform_0(%arg0: i32) -> (i32, i32, i32) {
    %c0_i32 = arith.constant 0 : i32
    %c0_i32_0 = arith.constant 0 : i32
    %c0_i32_1 = arith.constant 0 : i32
    return %c0_i32, %arg0, %c0_i32_0 : i32, i32, i32
  }
  func.func @transform_1(%arg0: i32) -> (i32, i32) {
    %c0_i32 = arith.constant 0 : i32
    %c0_i32_0 = arith.constant 0 : i32
    %c0_i32_1 = arith.constant 0 : i32
    return %c0_i32, %c0_i32_0 : i32, i32
  }
  func.func @transform_2(%arg0: i32) -> (i32, i32) {
    %c0_i32 = arith.constant 0 : i32
    %c0_i32_0 = arith.constant 0 : i32
    %c0_i32_1 = arith.constant 0 : i32
    return %c0_i32, %c0_i32_0 : i32, i32
  }
  func.func @transform_3(%arg0: i32) -> (i32, i32) {
    %c0_i32 = arith.constant 0 : i32
    %c0_i32_0 = arith.constant 0 : i32
    %c0_i32_1 = arith.constant 0 : i32
    return %c0_i32, %c0_i32_0 : i32, i32
  }
  func.func @transform_4(%arg0: i32) -> (i32, i32) {
    %c0_i32 = arith.constant 0 : i32
    %c0_i32_0 = arith.constant 0 : i32
    %c0_i32_1 = arith.constant 0 : i32
    return %c0_i32, %c0_i32_0 : i32, i32
  }
  func.func @transform_5(%arg0: i32) -> (i32, i32) {
    %c0_i32 = arith.constant 0 : i32
    %c0_i32_0 = arith.constant 0 : i32
    %c0_i32_1 = arith.constant 0 : i32
    return %c0_i32, %c0_i32_0 : i32, i32
  }
  func.func @transform_6(%arg0: i32) -> (i32, i32) {
    %c0_i32 = arith.constant 0 : i32
    %c0_i32_0 = arith.constant 0 : i32
    %c0_i32_1 = arith.constant 0 : i32
    return %c0_i32, %c0_i32_0 : i32, i32
  }
  func.func @transform_7(%arg0: i32) -> (i32, i32) {
    %c0_i32 = arith.constant 0 : i32
    %c0_i32_0 = arith.constant 0 : i32
    return %arg0, %c0_i32 : i32, i32
  }
}

</mosaic_0001>

<llo_original>
// kernel: lstm_predictor.1
$region0: #{lstm_predictor.1}
  #allocation0 [shape = 'u32[]', space=smem, size = 0x4, offset = 0x4, fixed_abs, tag = 'smem constant byte address 0x4 - core index']
  #allocation1 [shape = 'u32[144,128]{1,0:T(1,128)}', space=vmem, size = 0x12000, scoped, tag = 'internal scratch']
  %s0 = inlined_call_operand.vmem [shape: f32[8,8,8], index: 0, kind: input, shape index: {}]
  %s1 = inlined_call_operand.vmem [shape: f32[8,512], index: 1, kind: input, shape index: {}]
  %s2 = inlined_call_operand.vmem [shape: bf16[128,512], index: 2, kind: input, shape index: {}]
  %s3 = inlined_call_operand.vmem [shape: f32[64,32], index: 3, kind: input, shape index: {}]
  %s4 = inlined_call_operand.vmem [shape: f32[1,32], index: 4, kind: input, shape index: {}]
  %s5 = inlined_call_operand.vmem [shape: f32[32,3], index: 5, kind: input, shape index: {}]
  %s6 = inlined_call_operand.vmem [shape: f32[1,3], index: 6, kind: input, shape index: {}]
  %s7 = inlined_call_operand.vmem [shape: f32[8,3], index: 7, kind: output, shape index: {}]
  %s8 = sld [smem:[#allocation0]]
  $region38: #{lstm_predictor.1} parent=0
    _
  %s10 = ssub.s32 1, %s8
  %s11 = scalar_select 0, %s10, %s8
  // Predicated region
  $region2: #{lstm_predictor.1} parent=0 // pred_check
    _
  $region3: #{lstm_predictor.1} parent=0 // pred_check_branch
    %13 = sbr.rel (0) target = $region5
  $region4: #{lstm_predictor.1} parent=0 // pred_region
    _
  $region5: #{lstm_predictor.1} parent=0 // pred_fallthru
    _
  // Predicated region
  $region6: #{lstm_predictor.1} parent=0 // pred_check
    _
  $region7: #{lstm_predictor.1} parent=0 // pred_check_branch
    %15 = sbr.rel (0) target = $region9
  $region8: #{lstm_predictor.1} parent=0 // pred_region
    _
  $region9: #{lstm_predictor.1} parent=0 // pred_fallthru
    _
  // Predicated region
  $region10: #{lstm_predictor.1} parent=0 // pred_check
    _
  $region11: #{lstm_predictor.1} parent=0 // pred_check_branch
    %17 = sbr.rel (0) target = $region13
  $region12: #{lstm_predictor.1} parent=0 // pred_region
    _
  $region13: #{lstm_predictor.1} parent=0 // pred_fallthru
    _
  // Predicated region
  $region14: #{lstm_predictor.1} parent=0 // pred_check
    _
  $region15: #{lstm_predictor.1} parent=0 // pred_check_branch
    %19 = sbr.rel (0) target = $region17
  $region16: #{lstm_predictor.1} parent=0 // pred_region
    _
  $region17: #{lstm_predictor.1} parent=0 // pred_fallthru
    _
  // Predicated region
  $region18: #{lstm_predictor.1} parent=0 // pred_check
    _
  $region19: #{lstm_predictor.1} parent=0 // pred_check_branch
    %21 = sbr.rel (0) target = $region21
  $region20: #{lstm_predictor.1} parent=0 // pred_region
    _
  $region21: #{lstm_predictor.1} parent=0 // pred_fallthru
    _
  // Predicated region
  $region22: #{lstm_predictor.1} parent=0 // pred_check
    _
  $region23: #{lstm_predictor.1} parent=0 // pred_check_branch
    %23 = sbr.rel (0) target = $region25
  $region24: #{lstm_predictor.1} parent=0 // pred_region
    _
  $region25: #{lstm_predictor.1} parent=0 // pred_fallthru
    _
  // Predicated region
  $region26: #{lstm_predictor.1} parent=0 // pred_check
    _
  $region27: #{lstm_predictor.1} parent=0 // pred_check_branch
    %25 = sbr.rel (0) target = $region29
  $region28: #{lstm_predictor.1} parent=0 // pred_region
    _
  $region29: #{lstm_predictor.1} parent=0 // pred_fallthru
    _
  %v27 = vld [vmem:[%s2] sm:$0xff]
  %v28 = vld [vmem:[%s2 + $0x8] sm:$0xff]
  %v29 = vld [vmem:[%s2 + $0x10] sm:$0xff]
  %v30 = vld [vmem:[%s2 + $0x18] sm:$0xff]
  %v31 = vld [vmem:[%s2 + $0x20] sm:$0xff]
  %v32 = vld [vmem:[%s2 + $0x28] sm:$0xff]
  %v33 = vld [vmem:[%s2 + $0x30] sm:$0xff]
  %v34 = vld [vmem:[%s2 + $0x38] sm:$0xff]
  %v35 = vld [vmem:[%s2 + $0x40] sm:$0xff]
  %v36 = vld [vmem:[%s2 + $0x48] sm:$0xff]
  %v37 = vld [vmem:[%s2 + $0x50] sm:$0xff]
  %v38 = vld [vmem:[%s2 + $0x58] sm:$0xff]
  %v39 = vld [vmem:[%s2 + $0x60] sm:$0xff]
  %v40 = vld [vmem:[%s2 + $0x68] sm:$0xff]
  %v41 = vld [vmem:[%s2 + $0x70] sm:$0xff]
  %v42 = vld [vmem:[%s2 + $0x78] sm:$0xff]
  %v43 = vld [vmem:[%s2 + $0x80] sm:$0xff]
  %v44 = vld [vmem:[%s2 + $0x88] sm:$0xff]
  %v45 = vld [vmem:[%s2 + $0x90] sm:$0xff]
  %v46 = vld [vmem:[%s2 + $0x98] sm:$0xff]
  %v47 = vld [vmem:[%s2 + $0xa0] sm:$0xff]
  %v48 = vld [vmem:[%s2 + $0xa8] sm:$0xff]
  %v49 = vld [vmem:[%s2 + $0xb0] sm:$0xff]
  %v50 = vld [vmem:[%s2 + $0xb8] sm:$0xff]
  %v51 = vld [vmem:[%s2 + $0xc0] sm:$0xff]
  %v52 = vld [vmem:[%s2 + $0xc8] sm:$0xff]
  %v53 = vld [vmem:[%s2 + $0xd0] sm:$0xff]
  %v54 = vld [vmem:[%s2 + $0xd8] sm:$0xff]
  %v55 = vld [vmem:[%s2 + $0xe0] sm:$0xff]
  %v56 = vld [vmem:[%s2 + $0xe8] sm:$0xff]
  %v57 = vld [vmem:[%s2 + $0xf0] sm:$0xff]
  %v58 = vld [vmem:[%s2 + $0xf8] sm:$0xff]
  %v59 = vld [vmem:[%s0] sm:$0xff]
  %v60 = vld [vmem:[%s0 + $0x8] sm:$0xff]
  %v61 = vld [vmem:[%s0 + $0x10] sm:$0xff]
  %v62 = vld [vmem:[%s0 + $0x18] sm:$0xff]
  %v63 = vld [vmem:[%s0 + $0x20] sm:$0xff]
  %v64 = vld [vmem:[%s0 + $0x28] sm:$0xff]
  %v65 = vld [vmem:[%s0 + $0x30] sm:$0xff]
  %v66 = vld [vmem:[%s0 + $0x38] sm:$0xff]
  %v67 = vld [vmem:[%s1] sm:$0xff]
  %v68 = vld [vmem:[%s1 + $0x8] sm:$0xff]
  %v69 = vld [vmem:[%s1 + $0x10] sm:$0xff]
  %v70 = vld [vmem:[%s1 + $0x18] sm:$0xff]
  %vm71 = vcmask 64512
  %v73 = vsel %vm71, %v59, 0
  %v76 = vsel %vm71, %v60, 0
  %v79 = vsel %vm71, %v61, 0
  %v82 = vsel %vm71, %v62, 0
  %v85 = vsel %vm71, %v63, 0
  %v88 = vsel %vm71, %v64, 0
  %v91 = vsel %vm71, %v65, 0
  %v94 = vsel %vm71, %v66, 0
  %96 = vmatprep.subr.mxu0 0.0
  %97 = vmatpush1.msra.mxu0 0.0
  %98 = vmatprep.subr.mxu0 0.0
  %99 = vmatpush1.msra.mxu0 0.0
  %100 = vmatprep.subr.mxu0 0.0
  %101 = vmatpush1.msra.mxu0 0.0
  %102 = vmatprep.subr.mxu0 0.0
  %103 = vmatpush1.msra.mxu0 0.0
  %104 = vmatprep.subr.mxu0 0.0
  %105 = vmatpush1.msra.mxu0 0.0
  %106 = vmatprep.subr.mxu0 0.0
  %107 = vmatpush1.msra.mxu0 0.0
  %108 = vmatprep.subr.mxu0 0.0
  %109 = vmatpush1.msra.mxu0 0.0
  %110 = vmatprep.subr.mxu0 0.0
  %111 = vmatpush1.msra.mxu0 0.0
  %112 = vmatprep.subr.mxu0 0.0
  %113 = vmatpush1.msra.mxu0 0.0
  %114 = vmatprep.subr.mxu0 0.0
  %115 = vmatpush1.msra.mxu0 0.0
  %116 = vmatprep.subr.mxu0 0.0
  %117 = vmatpush1.msra.mxu0 0.0
  %118 = vmatprep.subr.mxu0 0.0
  %119 = vmatpush1.msra.mxu0 0.0
  %120 = vmatprep.subr.mxu0 0.0
  %121 = vmatpush1.msra.mxu0 0.0
  %122 = vmatprep.subr.mxu0 0.0
  %123 = vmatpush1.msra.mxu0 0.0
  %124 = vmatprep.subr.mxu0 0.0
  %125 = vmatpush1.msra.mxu0 0.0
  %126 = vmatprep.subr.mxu0 %v68
  %127 = vmatpush1.msra.mxu0 %v67
  %128 = vmatprep.subr.mxu0 0.0
  %129 = vmatpush2.msra.mxu0 0.0
  %130 = vmatprep.subr.mxu0 0.0
  %131 = vmatpush2.msra.mxu0 0.0
  %132 = vmatprep.subr.mxu0 0.0
  %133 = vmatpush2.msra.mxu0 0.0
  %134 = vmatprep.subr.mxu0 0.0
  %135 = vmatpush2.msra.mxu0 0.0
  %136 = vmatprep.subr.mxu0 0.0
  %137 = vmatpush2.msra.mxu0 0.0
  %138 = vmatprep.subr.mxu0 0.0
  %139 = vmatpush2.msra.mxu0 0.0
  %140 = vmatprep.subr.mxu0 0.0
  %141 = vmatpush2.msra.mxu0 0.0
  %142 = vmatprep.subr.mxu0 0.0
  %143 = vmatpush2.msra.mxu0 0.0
  %144 = vmatprep.subr.mxu0 0.0
  %145 = vmatpush2.msra.mxu0 0.0
  %146 = vmatprep.subr.mxu0 0.0
  %147 = vmatpush2.msra.mxu0 0.0
  %148 = vmatprep.subr.mxu0 0.0
  %149 = vmatpush2.msra.mxu0 0.0
  %150 = vmatprep.subr.mxu0 0.0
  %151 = vmatpush2.msra.mxu0 0.0
  %152 = vmatprep.subr.mxu0 0.0
  %153 = vmatpush2.msra.mxu0 0.0
  %154 = vmatprep.subr.mxu0 0.0
  %155 = vmatpush2.msra.mxu0 0.0
  %156 = vmatprep.subr.mxu0 0.0
  %157 = vmatpush2.msra.mxu0 0.0
  %158 = vmatprep.subr.mxu0 0.0
  %159 = vmatpush2.msra.mxu0 0.0
  %160 = vmatprep.mubr.f32.mxu0 0.0
  %161 = vmatmul.mubr.f32.gmra.mxu0 %v73
  %v162 = vpop.f32.mrf.mxu0
  %v163 = vadd.f32 0.0, %v162
  %v164 = vpop.f32.mrf.mxu0
  %165 = vmatprep.mubr.f32.mxu0 0.0
  %166 = vmatmul.mubr.f32.gmra.mxu0 %v76
  %v167 = vpop.f32.mrf.mxu0
  %v168 = vadd.f32 0.0, %v167
  %v169 = vpop.f32.mrf.mxu0
  %v170 = vadd.f32 0.0, %v169
  %171 = vmatprep.mubr.f32.mxu0 0.0
  %172 = vmatmul.mubr.f32.gmra.mxu0 %v79
  %v173 = vpop.f32.mrf.mxu0
  %v174 = vadd.f32 0.0, %v173
  %v175 = vpop.f32.mrf.mxu0
  %v176 = vadd.f32 0.0, %v175
  %177 = vmatprep.mubr.f32.mxu0 0.0
  %178 = vmatmul.mubr.f32.gmra.mxu0 %v82
  %v179 = vpop.f32.mrf.mxu0
  %v180 = vadd.f32 0.0, %v179
  %v181 = vpop.f32.mrf.mxu0
  %v182 = vadd.f32 0.0, %v181
  %183 = vmatprep.mubr.f32.mxu0 0.0
  %184 = vmatmul.mubr.f32.gmra.mxu0 %v85
  %v185 = vpop.f32.mrf.mxu0
  %v186 = vadd.f32 0.0, %v185
  %v187 = vpop.f32.mrf.mxu0
  %v188 = vadd.f32 0.0, %v187
  %189 = vmatprep.mubr.f32.mxu0 0.0
  %190 = vmatmul.mubr.f32.gmra.mxu0 %v88
  %v191 = vpop.f32.mrf.mxu0
  %v192 = vadd.f32 0.0, %v191
  %v193 = vpop.f32.mrf.mxu0
  %v194 = vadd.f32 0.0, %v193
  %195 = vmatprep.mubr.f32.mxu0 0.0
  %196 = vmatmul.mubr.f32.gmra.mxu0 %v91
  %v197 = vpop.f32.mrf.mxu0
  %v198 = vadd.f32 0.0, %v197
  %v199 = vpop.f32.mrf.mxu0
  %v200 = vadd.f32 0.0, %v199
  %201 = vmatprep.mubr.f32.mxu0 0.0
  %202 = vmatmul.mubr.f32.gmra.mxu0 %v94
  %v203 = vpop.f32.mrf.mxu0
  %v204 = vadd.f32 0.0, %v203
  %v205 = vpop.f32.mrf.mxu0
  %v206 = vadd.f32 0.0, %v205
  %207 = vdwg.mxu0
  %208 = vmatprep.subr.mxu0 0.0
  %209 = vmatpush1.msra.mxu0 0.0
  %210 = vmatprep.subr.mxu0 0.0
  %211 = vmatpush1.msra.mxu0 0.0
  %212 = vmatprep.subr.mxu0 0.0
  %213 = vmatpush1.msra.mxu0 0.0
  %214 = vmatprep.subr.mxu0 0.0
  %215 = vmatpush1.msra.mxu0 0.0
  %216 = vmatprep.subr.mxu0 0.0
  %217 = vmatpush1.msra.mxu0 0.0
  %218 = vmatprep.subr.mxu0 0.0
  %219 = vmatpush1.msra.mxu0 0.0
  %220 = vmatprep.subr.mxu0 0.0
  %221 = vmatpush1.msra.mxu0 0.0
  %222 = vmatprep.subr.mxu0 0.0
  %223 = vmatpush1.msra.mxu0 0.0
  %224 = vmatprep.subr.mxu0 0.0
  %225 = vmatpush1.msra.mxu0 0.0
  %226 = vmatprep.subr.mxu0 0.0
  %227 = vmatpush1.msra.mxu0 0.0
  %228 = vmatprep.subr.mxu0 0.0
  %229 = vmatpush1.msra.mxu0 0.0
  %230 = vmatprep.subr.mxu0 0.0
  %231 = vmatpush1.msra.mxu0 0.0
  %232 = vmatprep.subr.mxu0 0.0
  %233 = vmatpush1.msra.mxu0 0.0
  %234 = vmatprep.subr.mxu0 0.0
  %235 = vmatpush1.msra.mxu0 0.0
  %236 = vmatprep.subr.mxu0 0.0
  %237 = vmatpush1.msra.mxu0 0.0
  %238 = vmatprep.subr.mxu0 %v70
  %239 = vmatpush1.msra.mxu0 %v69
  %240 = vmatprep.subr.mxu0 0.0
  %241 = vmatpush2.msra.mxu0 0.0
  %242 = vmatprep.subr.mxu0 0.0
  %243 = vmatpush2.msra.mxu0 0.0
  %244 = vmatprep.subr.mxu0 0.0
  %245 = vmatpush2.msra.mxu0 0.0
  %246 = vmatprep.subr.mxu0 0.0
  %247 = vmatpush2.msra.mxu0 0.0
  %248 = vmatprep.subr.mxu0 0.0
  %249 = vmatpush2.msra.mxu0 0.0
  %250 = vmatprep.subr.mxu0 0.0
  %251 = vmatpush2.msra.mxu0 0.0
  %252 = vmatprep.subr.mxu0 0.0
  %253 = vmatpush2.msra.mxu0 0.0
  %254 = vmatprep.subr.mxu0 0.0
  %255 = vmatpush2.msra.mxu0 0.0
  %256 = vmatprep.subr.mxu0 0.0
  %257 = vmatpush2.msra.mxu0 0.0
  %258 = vmatprep.subr.mxu0 0.0
  %259 = vmatpush2.msra.mxu0 0.0
  %260 = vmatprep.subr.mxu0 0.0
  %261 = vmatpush2.msra.mxu0 0.0
  %262 = vmatprep.subr.mxu0 0.0
  %263 = vmatpush2.msra.mxu0 0.0
  %264 = vmatprep.subr.mxu0 0.0
  %265 = vmatpush2.msra.mxu0 0.0
  %266 = vmatprep.subr.mxu0 0.0
  %267 = vmatpush2.msra.mxu0 0.0
  %268 = vmatprep.subr.mxu0 0.0
  %269 = vmatpush2.msra.mxu0 0.0
  %270 = vmatprep.subr.mxu0 0.0
  %271 = vmatpush2.msra.mxu0 0.0
  %272 = vmatprep.mubr.f32.mxu0 0.0
  %273 = vmatmul.mubr.f32.gmra.mxu0 %v73
  %v274 = vpop.f32.mrf.mxu0
  %v275 = vadd.f32 0.0, %v274
  %v276 = vpop.f32.mrf.mxu0
  %v277 = vadd.f32 0.0, %v276
  %278 = vmatprep.mubr.f32.mxu0 0.0
  %279 = vmatmul.mubr.f32.gmra.mxu0 %v76
  %v280 = vpop.f32.mrf.mxu0
  %v281 = vadd.f32 0.0, %v280
  %v282 = vpop.f32.mrf.mxu0
  %v283 = vadd.f32 0.0, %v282
  %284 = vmatprep.mubr.f32.mxu0 0.0
  %285 = vmatmul.mubr.f32.gmra.mxu0 %v79
  %v286 = vpop.f32.mrf.mxu0
  %v287 = vadd.f32 0.0, %v286
  %v288 = vpop.f32.mrf.mxu0
  %v289 = vadd.f32 0.0, %v288
  %290 = vmatprep.mubr.f32.mxu0 0.0
  %291 = vmatmul.mubr.f32.gmra.mxu0 %v82
  %v292 = vpop.f32.mrf.mxu0
  %v293 = vadd.f32 0.0, %v292
  %v294 = vpop.f32.mrf.mxu0
  %v295 = vadd.f32 0.0, %v294
  %296 = vmatprep.mubr.f32.mxu0 0.0
  %297 = vmatmul.mubr.f32.gmra.mxu0 %v85
  %v298 = vpop.f32.mrf.mxu0
  %v299 = vadd.f32 0.0, %v298
  %v300 = vpop.f32.mrf.mxu0
  %v301 = vadd.f32 0.0, %v300
  %302 = vmatprep.mubr.f32.mxu0 0.0
  %303 = vmatmul.mubr.f32.gmra.mxu0 %v88
  %v304 = vpop.f32.mrf.mxu0
  %v305 = vadd.f32 0.0, %v304
  %v306 = vpop.f32.mrf.mxu0
  %v307 = vadd.f32 0.0, %v306
  %308 = vmatprep.mubr.f32.mxu0 0.0
  %309 = vmatmul.mubr.f32.gmra.mxu0 %v91
  %v310 = vpop.f32.mrf.mxu0
  %v311 = vadd.f32 0.0, %v310
  %v312 = vpop.f32.mrf.mxu0
  %v313 = vadd.f32 0.0, %v312
  %314 = vmatprep.mubr.f32.mxu0 0.0
  %315 = vmatmul.mubr.f32.gmra.mxu0 %v94
  %v316 = vpop.f32.mrf.mxu0
  %v317 = vadd.f32 0.0, %v316
  %v318 = vpop.f32.mrf.mxu0
  %v319 = vadd.f32 0.0, %v318
  %320 = vdwg.mxu0
  %v321 = vmul.f32 %v163, 0.5
  %v322 = vtanh.pop %v321
  %v323 = vadd.f32 %v322, 1.0
  %v324 = vmul.f32 %v323, 0.5
  %v325 = vmul.f32 %v275, 0.5
  %v326 = vtanh.pop %v325
  %v327 = vadd.f32 %v326, 1.0
  %v328 = vmul.f32 %v327, 0.5
  %v329 = vtanh.pop %v277
  %v330 = vmul.f32 %v324, %v329
  %v331 = vtanh.pop %v330
  %v332 = vmul.f32 %v328, %v331
  %vm333 = vcmask 523264
  %v334 = vsel %vm333, 0.0, %v330
  %v335 = vsel %vm333, 0.0, %v332
  %v336 = vpack.c.bf16 %v335, %v335
  %v369 = vunpack.c.l.b16 %v27
  %v370 = vunpack.c.h.b16 %v27
  %v371 = vunpack.c.l.b16 %v28
  %v372 = vunpack.c.h.b16 %v28
  %v373 = vunpack.c.l.b16 %v29
  %v374 = vunpack.c.h.b16 %v29
  %v375 = vunpack.c.l.b16 %v30
  %v376 = vunpack.c.h.b16 %v30
  %v377 = vunpack.c.l.b16 %v31
  %v378 = vunpack.c.h.b16 %v31
  %v379 = vunpack.c.l.b16 %v32
  %v380 = vunpack.c.h.b16 %v32
  %v381 = vunpack.c.l.b16 %v33
  %v382 = vunpack.c.h.b16 %v33
  %v383 = vunpack.c.l.b16 %v34
  %v384 = vunpack.c.h.b16 %v34
  %v385 = vunpack.c.l.b16 %v35
  %v386 = vunpack.c.h.b16 %v35
  %v387 = vunpack.c.l.b16 %v36
  %v388 = vunpack.c.h.b16 %v36
  %v389 = vunpack.c.l.b16 %v37
  %v390 = vunpack.c.h.b16 %v37
  %v391 = vunpack.c.l.b16 %v38
  %v392 = vunpack.c.h.b16 %v38
  %v393 = vunpack.c.l.b16 %v39
  %v394 = vunpack.c.h.b16 %v39
  %v395 = vunpack.c.l.b16 %v40
  %v396 = vunpack.c.h.b16 %v40
  %v397 = vunpack.c.l.b16 %v41
  %v398 = vunpack.c.h.b16 %v41
  %v399 = vunpack.c.l.b16 %v42
  %v400 = vunpack.c.h.b16 %v42
  %v401 = vunpack.c.l.b16 %v43
  %v402 = vunpack.c.h.b16 %v43
  %v403 = vunpack.c.l.b16 %v44
  %v404 = vunpack.c.h.b16 %v44
  %v405 = vunpack.c.l.b16 %v45
  %v406 = vunpack.c.h.b16 %v45
  %v407 = vunpack.c.l.b16 %v46
  %v408 = vunpack.c.h.b16 %v46
  %v409 = vunpack.c.l.b16 %v47
  %v410 = vunpack.c.h.b16 %v47
  %v411 = vunpack.c.l.b16 %v48
  %v412 = vunpack.c.h.b16 %v48
  %v413 = vunpack.c.l.b16 %v49
  %v414 = vunpack.c.h.b16 %v49
  %v415 = vunpack.c.l.b16 %v50
  %v416 = vunpack.c.h.b16 %v50
  %v417 = vunpack.c.l.b16 %v51
  %v418 = vunpack.c.h.b16 %v51
  %v419 = vunpack.c.l.b16 %v52
  %v420 = vunpack.c.h.b16 %v52
  %v421 = vunpack.c.l.b16 %v53
  %v422 = vunpack.c.h.b16 %v53
  %v423 = vunpack.c.l.b16 %v54
  %v424 = vunpack.c.h.b16 %v54
  %v425 = vunpack.c.l.b16 %v55
  %v426 = vunpack.c.h.b16 %v55
  %v427 = vunpack.c.l.b16 %v56
  %v428 = vunpack.c.h.b16 %v56
  %v429 = vunpack.c.l.b16 %v57
  %v430 = vunpack.c.h.b16 %v57
  %v431 = vunpack.c.l.b16 %v58
  %v432 = vunpack.c.h.b16 %v58
  %v433 = vpack.c.b16 %v373, %v369
  %v434 = vpack.c.b16 %v374, %v370
  %v435 = vpack.c.b16 %v375, %v371
  %v436 = vpack.c.b16 %v376, %v372
  %v437 = vpack.c.b16 %v381, %v377
  %v438 = vpack.c.b16 %v382, %v378
  %v439 = vpack.c.b16 %v383, %v379
  %v440 = vpack.c.b16 %v384, %v380
  %v441 = vpack.c.b16 %v389, %v385
  %v442 = vpack.c.b16 %v390, %v386
  %v443 = vpack.c.b16 %v391, %v387
  %v444 = vpack.c.b16 %v392, %v388
  %v445 = vpack.c.b16 %v397, %v393
  %v446 = vpack.c.b16 %v398, %v394
  %v447 = vpack.c.b16 %v399, %v395
  %v448 = vpack.c.b16 %v400, %v396
  %v449 = vpack.c.b16 %v405, %v401
  %v450 = vpack.c.b16 %v406, %v402
  %v451 = vpack.c.b16 %v407, %v403
  %v452 = vpack.c.b16 %v408, %v404
  %v453 = vpack.c.b16 %v413, %v409
  %v454 = vpack.c.b16 %v414, %v410
  %v455 = vpack.c.b16 %v415, %v411
  %v456 = vpack.c.b16 %v416, %v412
  %v457 = vpack.c.b16 %v421, %v417
  %v458 = vpack.c.b16 %v422, %v418
  %v459 = vpack.c.b16 %v423, %v419
  %v460 = vpack.c.b16 %v424, %v420
  %v461 = vpack.c.b16 %v429, %v425
  %v462 = vpack.c.b16 %v430, %v426
  %v463 = vpack.c.b16 %v431, %v427
  %v464 = vpack.c.b16 %v432, %v428
  %497 = vmatprep.subr.bf16.mxu0 %v462
  %498 = vmatpush1.bf16.msra.mxu0 %v461
  %499 = vmatprep.subr.bf16.mxu0 %v458
  %500 = vmatpush1.bf16.msra.mxu0 %v457
  %501 = vmatprep.subr.bf16.mxu0 %v454
  %502 = vmatpush1.bf16.msra.mxu0 %v453
  %503 = vmatprep.subr.bf16.mxu0 %v450
  %504 = vmatpush1.bf16.msra.mxu0 %v449
  %505 = vmatprep.subr.bf16.mxu0 %v446
  %506 = vmatpush1.bf16.msra.mxu0 %v445
  %507 = vmatprep.subr.bf16.mxu0 %v442
  %508 = vmatpush1.bf16.msra.mxu0 %v441
  %509 = vmatprep.subr.bf16.mxu0 %v438
  %510 = vmatpush1.bf16.msra.mxu0 %v437
  %511 = vmatprep.subr.bf16.mxu0 %v434
  %512 = vmatpush1.bf16.msra.mxu0 %v433
  %513 = vmatprep.subr.bf16.mxu0 0
  %514 = vmatpush2.bf16.msra.mxu0 0
  %515 = vmatprep.subr.bf16.mxu0 0
  %516 = vmatpush2.bf16.msra.mxu0 0
  %517 = vmatprep.subr.bf16.mxu0 0
  %518 = vmatpush2.bf16.msra.mxu0 0
  %519 = vmatprep.subr.bf16.mxu0 0
  %520 = vmatpush2.bf16.msra.mxu0 0
  %521 = vmatprep.subr.bf16.mxu0 0
  %522 = vmatpush2.bf16.msra.mxu0 0
  %523 = vmatprep.subr.bf16.mxu0 0
  %524 = vmatpush2.bf16.msra.mxu0 0
  %525 = vmatprep.subr.bf16.mxu0 0
  %526 = vmatpush2.bf16.msra.mxu0 0
  %527 = vmatprep.subr.bf16.mxu0 0
  %528 = vmatpush2.bf16.msra.mxu0 0
  %529 = vmatprep.mubr.bf16.mxu0 0
  %530 = vmatmul.mubr.bf16.gmra.mxu0 %v336
  %v531 = vpop.f32.mrf.mxu0
  %v532 = vadd.f32 %v168, %v531
  %v533 = vpop.f32.mrf.mxu0
  %v534 = vadd.f32 %v170, %v533
  %v535 = vpop.f32.mrf.mxu0
  %v536 = vpop.f32.mrf.mxu0
  %537 = vdwg.mxu0
  %538 = vmatprep.subr.bf16.mxu0 %v464
  %539 = vmatpush1.bf16.msra.mxu0 %v463
  %540 = vmatprep.subr.bf16.mxu0 %v460
  %541 = vmatpush1.bf16.msra.mxu0 %v459
  %542 = vmatprep.subr.bf16.mxu0 %v456
  %543 = vmatpush1.bf16.msra.mxu0 %v455
  %544 = vmatprep.subr.bf16.mxu0 %v452
  %545 = vmatpush1.bf16.msra.mxu0 %v451
  %546 = vmatprep.subr.bf16.mxu0 %v448
  %547 = vmatpush1.bf16.msra.mxu0 %v447
  %548 = vmatprep.subr.bf16.mxu0 %v444
  %549 = vmatpush1.bf16.msra.mxu0 %v443
  %550 = vmatprep.subr.bf16.mxu0 %v440
  %551 = vmatpush1.bf16.msra.mxu0 %v439
  %552 = vmatprep.subr.bf16.mxu0 %v436
  %553 = vmatpush1.bf16.msra.mxu0 %v435
  %554 = vmatprep.subr.bf16.mxu0 0
  %555 = vmatpush2.bf16.msra.mxu0 0
  %556 = vmatprep.subr.bf16.mxu0 0
  %557 = vmatpush2.bf16.msra.mxu0 0
  %558 = vmatprep.subr.bf16.mxu0 0
  %559 = vmatpush2.bf16.msra.mxu0 0
  %560 = vmatprep.subr.bf16.mxu0 0
  %561 = vmatpush2.bf16.msra.mxu0 0
  %562 = vmatprep.subr.bf16.mxu0 0
  %563 = vmatpush2.bf16.msra.mxu0 0
  %564 = vmatprep.subr.bf16.mxu0 0
  %565 = vmatpush2.bf16.msra.mxu0 0
  %566 = vmatprep.subr.bf16.mxu0 0
  %567 = vmatpush2.bf16.msra.mxu0 0
  %568 = vmatprep.subr.bf16.mxu0 0
  %569 = vmatpush2.bf16.msra.mxu0 0
  %570 = vmatprep.mubr.bf16.mxu0 0
  %571 = vmatmul.mubr.bf16.gmra.mxu0 %v336
  %v572 = vpop.f32.mrf.mxu0
  %v573 = vadd.f32 %v281, %v572
  %v574 = vpop.f32.mrf.mxu0
  %v575 = vadd.f32 %v283, %v574
  %v576 = vpop.f32.mrf.mxu0
  %v577 = vpop.f32.mrf.mxu0
  %578 = vdwg.mxu0
  %v579 = vmul.f32 %v532, 0.5
  %v580 = vmul.f32 %v534, 0.5
  %v581 = vmul.f32 %v573, 0.5
  %v582 = vtanh.pop %v579
  %v583 = vtanh.pop %v580
  %v584 = vtanh.pop %v581
  %v585 = vadd.f32 %v582, 1.0
  %v586 = vadd.f32 %v583, 1.0
  %v587 = vadd.f32 %v584, 1.0
  %v588 = vmul.f32 %v585, 0.5
  %v589 = vmul.f32 %v586, 0.5
  %v590 = vmul.f32 %v587, 0.5
  %v591 = vtanh.pop %v575
  %v592 = vmul.f32 %v589, %v334
  %v593 = vmul.f32 %v588, %v591
  %v594 = vadd.f32 %v592, %v593
  %v595 = vtanh.pop %v594
  %v596 = vmul.f32 %v590, %v595
  %v597 = vpack.c.bf16 %v596, %v596
  %598 = vmatprep.subr.bf16.mxu0 %v462
  %599 = vmatpush1.bf16.msra.mxu0 %v461
  %600 = vmatprep.subr.bf16.mxu0 %v458
  %601 = vmatpush1.bf16.msra.mxu0 %v457
  %602 = vmatprep.subr.bf16.mxu0 %v454
  %603 = vmatpush1.bf16.msra.mxu0 %v453
  %604 = vmatprep.subr.bf16.mxu0 %v450
  %605 = vmatpush1.bf16.msra.mxu0 %v449
  %606 = vmatprep.subr.bf16.mxu0 %v446
  %607 = vmatpush1.bf16.msra.mxu0 %v445
  %608 = vmatprep.subr.bf16.mxu0 %v442
  %609 = vmatpush1.bf16.msra.mxu0 %v441
  %610 = vmatprep.subr.bf16.mxu0 %v438
  %611 = vmatpush1.bf16.msra.mxu0 %v437
  %612 = vmatprep.subr.bf16.mxu0 %v434
  %613 = vmatpush1.bf16.msra.mxu0 %v433
  %614 = vmatprep.subr.bf16.mxu0 0
  %615 = vmatpush2.bf16.msra.mxu0 0
  %616 = vmatprep.subr.bf16.mxu0 0
  %617 = vmatpush2.bf16.msra.mxu0 0
  %618 = vmatprep.subr.bf16.mxu0 0
  %619 = vmatpush2.bf16.msra.mxu0 0
  %620 = vmatprep.subr.bf16.mxu0 0
  %621 = vmatpush2.bf16.msra.mxu0 0
  %622 = vmatprep.subr.bf16.mxu0 0
  %623 = vmatpush2.bf16.msra.mxu0 0
  %624 = vmatprep.subr.bf16.mxu0 0
  %625 = vmatpush2.bf16.msra.mxu0 0
  %626 = vmatprep.subr.bf16.mxu0 0
  %627 = vmatpush2.bf16.msra.mxu0 0
  %628 = vmatprep.subr.bf16.mxu0 0
  %629 = vmatpush2.bf16.msra.mxu0 0
  %630 = vmatprep.mubr.bf16.mxu0 0
  %631 = vmatmul.mubr.bf16.gmra.mxu0 %v597
  %v632 = vpop.f32.mrf.mxu0
  %v633 = vadd.f32 %v174, %v632
  %v634 = vpop.f32.mrf.mxu0
  %v635 = vadd.f32 %v176, %v634
  %v636 = vpop.f32.mrf.mxu0
  %v637 = vpop.f32.mrf.mxu0
  %638 = vdwg.mxu0
  %639 = vmatprep.subr.bf16.mxu0 %v464
  %640 = vmatpush1.bf16.msra.mxu0 %v463
  %641 = vmatprep.subr.bf16.mxu0 %v460
  %642 = vmatpush1.bf16.msra.mxu0 %v459
  %643 = vmatprep.subr.bf16.mxu0 %v456
  %644 = vmatpush1.bf16.msra.mxu0 %v455
  %645 = vmatprep.subr.bf16.mxu0 %v452
  %646 = vmatpush1.bf16.msra.mxu0 %v451
  %647 = vmatprep.subr.bf16.mxu0 %v448
  %648 = vmatpush1.bf16.msra.mxu0 %v447
  %649 = vmatprep.subr.bf16.mxu0 %v444
  %650 = vmatpush1.bf16.msra.mxu0 %v443
  %651 = vmatprep.subr.bf16.mxu0 %v440
  %652 = vmatpush1.bf16.msra.mxu0 %v439
  %653 = vmatprep.subr.bf16.mxu0 %v436
  %654 = vmatpush1.bf16.msra.mxu0 %v435
  %655 = vmatprep.subr.bf16.mxu0 0
  %656 = vmatpush2.bf16.msra.mxu0 0
  %657 = vmatprep.subr.bf16.mxu0 0
  %658 = vmatpush2.bf16.msra.mxu0 0
  %659 = vmatprep.subr.bf16.mxu0 0
  %660 = vmatpush2.bf16.msra.mxu0 0
  %661 = vmatprep.subr.bf16.mxu0 0
  %662 = vmatpush2.bf16.msra.mxu0 0
  %663 = vmatprep.subr.bf16.mxu0 0
  %664 = vmatpush2.bf16.msra.mxu0 0
  %665 = vmatprep.subr.bf16.mxu0 0
  %666 = vmatpush2.bf16.msra.mxu0 0
  %667 = vmatprep.subr.bf16.mxu0 0
  %668 = vmatpush2.bf16.msra.mxu0 0
  %669 = vmatprep.subr.bf16.mxu0 0
  %670 = vmatpush2.bf16.msra.mxu0 0
  %671 = vmatprep.mubr.bf16.mxu0 0
  %672 = vmatmul.mubr.bf16.gmra.mxu0 %v597
  %v673 = vpop.f32.mrf.mxu0
  %v674 = vadd.f32 %v287, %v673
  %v675 = vpop.f32.mrf.mxu0
  %v676 = vadd.f32 %v289, %v675
  %v677 = vpop.f32.mrf.mxu0
  %v678 = vpop.f32.mrf.mxu0
  %679 = vdwg.mxu0
  %v680 = vmul.f32 %v633, 0.5
  %v681 = vmul.f32 %v635, 0.5
  %v682 = vmul.f32 %v674, 0.5
  %v683 = vtanh.pop %v680
  %v684 = vtanh.pop %v681
  %v685 = vtanh.pop %v682
  %v686 = vadd.f32 %v683, 1.0
  %v687 = vadd.f32 %v684, 1.0
  %v688 = vadd.f32 %v685, 1.0
  %v689 = vmul.f32 %v686, 0.5
  %v690 = vmul.f32 %v687, 0.5
  %v691 = vmul.f32 %v688, 0.5
  %v692 = vtanh.pop %v676
  %v693 = vmul.f32 %v690, %v594
  %v694 = vmul.f32 %v689, %v692
  %v695 = vadd.f32 %v693, %v694
  %v696 = vtanh.pop %v695
  %v697 = vmul.f32 %v691, %v696
  %v698 = vpack.c.bf16 %v697, %v697
  %699 = vmatprep.subr.bf16.mxu0 %v462
  %700 = vmatpush1.bf16.msra.mxu0 %v461
  %701 = vmatprep.subr.bf16.mxu0 %v458
  %702 = vmatpush1.bf16.msra.mxu0 %v457
  %703 = vmatprep.subr.bf16.mxu0 %v454
  %704 = vmatpush1.bf16.msra.mxu0 %v453
  %705 = vmatprep.subr.bf16.mxu0 %v450
  %706 = vmatpush1.bf16.msra.mxu0 %v449
  %707 = vmatprep.subr.bf16.mxu0 %v446
  %708 = vmatpush1.bf16.msra.mxu0 %v445
  %709 = vmatprep.subr.bf16.mxu0 %v442
  %710 = vmatpush1.bf16.msra.mxu0 %v441
  %711 = vmatprep.subr.bf16.mxu0 %v438
  %712 = vmatpush1.bf16.msra.mxu0 %v437
  %713 = vmatprep.subr.bf16.mxu0 %v434
  %714 = vmatpush1.bf16.msra.mxu0 %v433
  %715 = vmatprep.subr.bf16.mxu0 0
  %716 = vmatpush2.bf16.msra.mxu0 0
  %717 = vmatprep.subr.bf16.mxu0 0
  %718 = vmatpush2.bf16.msra.mxu0 0
  %719 = vmatprep.subr.bf16.mxu0 0
  %720 = vmatpush2.bf16.msra.mxu0 0
  %721 = vmatprep.subr.bf16.mxu0 0
  %722 = vmatpush2.bf16.msra.mxu0 0
  %723 = vmatprep.subr.bf16.mxu0 0
  %724 = vmatpush2.bf16.msra.mxu0 0
  %725 = vmatprep.subr.bf16.mxu0 0
  %726 = vmatpush2.bf16.msra.mxu0 0
  %727 = vmatprep.subr.bf16.mxu0 0
  %728 = vmatpush2.bf16.msra.mxu0 0
  %729 = vmatprep.subr.bf16.mxu0 0
  %730 = vmatpush2.bf16.msra.mxu0 0
  %731 = vmatprep.mubr.bf16.mxu0 0
  %732 = vmatmul.mubr.bf16.gmra.mxu0 %v698
  %v733 = vpop.f32.mrf.mxu0
  %v734 = vadd.f32 %v180, %v733
  %v735 = vpop.f32.mrf.mxu0
  %v736 = vadd.f32 %v182, %v735
  %v737 = vpop.f32.mrf.mxu0
  %v738 = vpop.f32.mrf.mxu0
  %739 = vdwg.mxu0
  %740 = vmatprep.subr.bf16.mxu0 %v464
  %741 = vmatpush1.bf16.msra.mxu0 %v463
  %742 = vmatprep.subr.bf16.mxu0 %v460
  %743 = vmatpush1.bf16.msra.mxu0 %v459
  %744 = vmatprep.subr.bf16.mxu0 %v456
  %745 = vmatpush1.bf16.msra.mxu0 %v455
  %746 = vmatprep.subr.bf16.mxu0 %v452
  %747 = vmatpush1.bf16.msra.mxu0 %v451
  %748 = vmatprep.subr.bf16.mxu0 %v448
  %749 = vmatpush1.bf16.msra.mxu0 %v447
  %750 = vmatprep.subr.bf16.mxu0 %v444
  %751 = vmatpush1.bf16.msra.mxu0 %v443
  %752 = vmatprep.subr.bf16.mxu0 %v440
  %753 = vmatpush1.bf16.msra.mxu0 %v439
  %754 = vmatprep.subr.bf16.mxu0 %v436
  %755 = vmatpush1.bf16.msra.mxu0 %v435
  %756 = vmatprep.subr.bf16.mxu0 0
  %757 = vmatpush2.bf16.msra.mxu0 0
  %758 = vmatprep.subr.bf16.mxu0 0
  %759 = vmatpush2.bf16.msra.mxu0 0
  %760 = vmatprep.subr.bf16.mxu0 0
  %761 = vmatpush2.bf16.msra.mxu0 0
  %762 = vmatprep.subr.bf16.mxu0 0
  %763 = vmatpush2.bf16.msra.mxu0 0
  %764 = vmatprep.subr.bf16.mxu0 0
  %765 = vmatpush2.bf16.msra.mxu0 0
  %766 = vmatprep.subr.bf16.mxu0 0
  %767 = vmatpush2.bf16.msra.mxu0 0
  %768 = vmatprep.subr.bf16.mxu0 0
  %769 = vmatpush2.bf16.msra.mxu0 0
  %770 = vmatprep.subr.bf16.mxu0 0
  %771 = vmatpush2.bf16.msra.mxu0 0
  %772 = vmatprep.mubr.bf16.mxu0 0
  %773 = vmatmul.mubr.bf16.gmra.mxu0 %v698
  %v774 = vpop.f32.mrf.mxu0
  %v775 = vadd.f32 %v293, %v774
  %v776 = vpop.f32.mrf.mxu0
  %v777 = vadd.f32 %v295, %v776
  %v778 = vpop.f32.mrf.mxu0
  %v779 = vpop.f32.mrf.mxu0
  %780 = vdwg.mxu0
  %v781 = vmul.f32 %v734, 0.5
  %v782 = vmul.f32 %v736, 0.5
  %v783 = vmul.f32 %v775, 0.5
  %v784 = vtanh.pop %v781
  %v785 = vtanh.pop %v782
  %v786 = vtanh.pop %v783
  %v787 = vadd.f32 %v784, 1.0
  %v788 = vadd.f32 %v785, 1.0
  %v789 = vadd.f32 %v786, 1.0
  %v790 = vmul.f32 %v787, 0.5
  %v791 = vmul.f32 %v788, 0.5
  %v792 = vmul.f32 %v789, 0.5
  %v793 = vtanh.pop %v777
  %v794 = vmul.f32 %v791, %v695
  %v795 = vmul.f32 %v790, %v793
  %v796 = vadd.f32 %v794, %v795
  %v797 = vtanh.pop %v796
  %v798 = vmul.f32 %v792, %v797
  %v799 = vpack.c.bf16 %v798, %v798
  %800 = vmatprep.subr.bf16.mxu0 %v462
  %801 = vmatpush1.bf16.msra.mxu0 %v461
  %802 = vmatprep.subr.bf16.mxu0 %v458
  %803 = vmatpush1.bf16.msra.mxu0 %v457
  %804 = vmatprep.subr.bf16.mxu0 %v454
  %805 = vmatpush1.bf16.msra.mxu0 %v453
  %806 = vmatprep.subr.bf16.mxu0 %v450
  %807 = vmatpush1.bf16.msra.mxu0 %v449
  %808 = vmatprep.subr.bf16.mxu0 %v446
  %809 = vmatpush1.bf16.msra.mxu0 %v445
  %810 = vmatprep.subr.bf16.mxu0 %v442
  %811 = vmatpush1.bf16.msra.mxu0 %v441
  %812 = vmatprep.subr.bf16.mxu0 %v438
  %813 = vmatpush1.bf16.msra.mxu0 %v437
  %814 = vmatprep.subr.bf16.mxu0 %v434
  %815 = vmatpush1.bf16.msra.mxu0 %v433
  %816 = vmatprep.subr.bf16.mxu0 0
  %817 = vmatpush2.bf16.msra.mxu0 0
  %818 = vmatprep.subr.bf16.mxu0 0
  %819 = vmatpush2.bf16.msra.mxu0 0
  %820 = vmatprep.subr.bf16.mxu0 0
  %821 = vmatpush2.bf16.msra.mxu0 0
  %822 = vmatprep.subr.bf16.mxu0 0
  %823 = vmatpush2.bf16.msra.mxu0 0
  %824 = vmatprep.subr.bf16.mxu0 0
  %825 = vmatpush2.bf16.msra.mxu0 0
  %826 = vmatprep.subr.bf16.mxu0 0
  %827 = vmatpush2.bf16.msra.mxu0 0
  %828 = vmatprep.subr.bf16.mxu0 0
  %829 = vmatpush2.bf16.msra.mxu0 0
  %830 = vmatprep.subr.bf16.mxu0 0
  %831 = vmatpush2.bf16.msra.mxu0 0
  %832 = vmatprep.mubr.bf16.mxu0 0
  %833 = vmatmul.mubr.bf16.gmra.mxu0 %v799
  %v834 = vpop.f32.mrf.mxu0
  %v835 = vadd.f32 %v186, %v834
  %v836 = vpop.f32.mrf.mxu0
  %v837 = vadd.f32 %v188, %v836
  %v838 = vpop.f32.mrf.mxu0
  %v839 = vpop.f32.mrf.mxu0
  %840 = vdwg.mxu0
  %841 = vmatprep.subr.bf16.mxu0 %v464
  %842 = vmatpush1.bf16.msra.mxu0 %v463
  %843 = vmatprep.subr.bf16.mxu0 %v460
  %844 = vmatpush1.bf16.msra.mxu0 %v459
  %845 = vmatprep.subr.bf16.mxu0 %v456
  %846 = vmatpush1.bf16.msra.mxu0 %v455
  %847 = vmatprep.subr.bf16.mxu0 %v452
  %848 = vmatpush1.bf16.msra.mxu0 %v451
  %849 = vmatprep.subr.bf16.mxu0 %v448
  %850 = vmatpush1.bf16.msra.mxu0 %v447
  %851 = vmatprep.subr.bf16.mxu0 %v444
  %852 = vmatpush1.bf16.msra.mxu0 %v443
  %853 = vmatprep.subr.bf16.mxu0 %v440
  %854 = vmatpush1.bf16.msra.mxu0 %v439
  %855 = vmatprep.subr.bf16.mxu0 %v436
  %856 = vmatpush1.bf16.msra.mxu0 %v435
  %857 = vmatprep.subr.bf16.mxu0 0
  %858 = vmatpush2.bf16.msra.mxu0 0
  %859 = vmatprep.subr.bf16.mxu0 0
  %860 = vmatpush2.bf16.msra.mxu0 0
  %861 = vmatprep.subr.bf16.mxu0 0
  %862 = vmatpush2.bf16.msra.mxu0 0
  %863 = vmatprep.subr.bf16.mxu0 0
  %864 = vmatpush2.bf16.msra.mxu0 0
  %865 = vmatprep.subr.bf16.mxu0 0
  %866 = vmatpush2.bf16.msra.mxu0 0
  %867 = vmatprep.subr.bf16.mxu0 0
  %868 = vmatpush2.bf16.msra.mxu0 0
  %869 = vmatprep.subr.bf16.mxu0 0
  %870 = vmatpush2.bf16.msra.mxu0 0
  %871 = vmatprep.subr.bf16.mxu0 0
  %872 = vmatpush2.bf16.msra.mxu0 0
  %873 = vmatprep.mubr.bf16.mxu0 0
  %874 = vmatmul.mubr.bf16.gmra.mxu0 %v799
  %v875 = vpop.f32.mrf.mxu0
  %v876 = vadd.f32 %v299, %v875
  %v877 = vpop.f32.mrf.mxu0
  %v878 = vadd.f32 %v301, %v877
  %v879 = vpop.f32.mrf.mxu0
  %v880 = vpop.f32.mrf.mxu0
  %881 = vdwg.mxu0
  %v882 = vmul.f32 %v835, 0.5
  %v883 = vmul.f32 %v837, 0.5
  %v884 = vmul.f32 %v876, 0.5
  %v885 = vtanh.pop %v882
  %v886 = vtanh.pop %v883
  %v887 = vtanh.pop %v884
  %v888 = vadd.f32 %v885, 1.0
  %v889 = vadd.f32 %v886, 1.0
  %v890 = vadd.f32 %v887, 1.0
  %v891 = vmul.f32 %v888, 0.5
  %v892 = vmul.f32 %v889, 0.5
  %v893 = vmul.f32 %v890, 0.5
  %v894 = vtanh.pop %v878
  %v895 = vmul.f32 %v892, %v796
  %v896 = vmul.f32 %v891, %v894
  %v897 = vadd.f32 %v895, %v896
  %v898 = vtanh.pop %v897
  %v899 = vmul.f32 %v893, %v898
  %v900 = vpack.c.bf16 %v899, %v899
  %901 = vmatprep.subr.bf16.mxu0 %v462
  %902 = vmatpush1.bf16.msra.mxu0 %v461
  %903 = vmatprep.subr.bf16.mxu0 %v458
  %904 = vmatpush1.bf16.msra.mxu0 %v457
  %905 = vmatprep.subr.bf16.mxu0 %v454
  %906 = vmatpush1.bf16.msra.mxu0 %v453
  %907 = vmatprep.subr.bf16.mxu0 %v450
  %908 = vmatpush1.bf16.msra.mxu0 %v449
  %909 = vmatprep.subr.bf16.mxu0 %v446
  %910 = vmatpush1.bf16.msra.mxu0 %v445
  %911 = vmatprep.subr.bf16.mxu0 %v442
  %912 = vmatpush1.bf16.msra.mxu0 %v441
  %913 = vmatprep.subr.bf16.mxu0 %v438
  %914 = vmatpush1.bf16.msra.mxu0 %v437
  %915 = vmatprep.subr.bf16.mxu0 %v434
  %916 = vmatpush1.bf16.msra.mxu0 %v433
  %917 = vmatprep.subr.bf16.mxu0 0
  %918 = vmatpush2.bf16.msra.mxu0 0
  %919 = vmatprep.subr.bf16.mxu0 0
  %920 = vmatpush2.bf16.msra.mxu0 0
  %921 = vmatprep.subr.bf16.mxu0 0
  %922 = vmatpush2.bf16.msra.mxu0 0
  %923 = vmatprep.subr.bf16.mxu0 0
  %924 = vmatpush2.bf16.msra.mxu0 0
  %925 = vmatprep.subr.bf16.mxu0 0
  %926 = vmatpush2.bf16.msra.mxu0 0
  %927 = vmatprep.subr.bf16.mxu0 0
  %928 = vmatpush2.bf16.msra.mxu0 0
  %929 = vmatprep.subr.bf16.mxu0 0
  %930 = vmatpush2.bf16.msra.mxu0 0
  %931 = vmatprep.subr.bf16.mxu0 0
  %932 = vmatpush2.bf16.msra.mxu0 0
  %933 = vmatprep.mubr.bf16.mxu0 0
  %934 = vmatmul.mubr.bf16.gmra.mxu0 %v900
  %v935 = vpop.f32.mrf.mxu0
  %v936 = vadd.f32 %v192, %v935
  %v937 = vpop.f32.mrf.mxu0
  %v938 = vadd.f32 %v194, %v937
  %v939 = vpop.f32.mrf.mxu0
  %v940 = vpop.f32.mrf.mxu0
  %941 = vdwg.mxu0
  %942 = vmatprep.subr.bf16.mxu0 %v464
  %943 = vmatpush1.bf16.msra.mxu0 %v463
  %944 = vmatprep.subr.bf16.mxu0 %v460
  %945 = vmatpush1.bf16.msra.mxu0 %v459
  %946 = vmatprep.subr.bf16.mxu0 %v456
  %947 = vmatpush1.bf16.msra.mxu0 %v455
  %948 = vmatprep.subr.bf16.mxu0 %v452
  %949 = vmatpush1.bf16.msra.mxu0 %v451
  %950 = vmatprep.subr.bf16.mxu0 %v448
  %951 = vmatpush1.bf16.msra.mxu0 %v447
  %952 = vmatprep.subr.bf16.mxu0 %v444
  %953 = vmatpush1.bf16.msra.mxu0 %v443
  %954 = vmatprep.subr.bf16.mxu0 %v440
  %955 = vmatpush1.bf16.msra.mxu0 %v439
  %956 = vmatprep.subr.bf16.mxu0 %v436
  %957 = vmatpush1.bf16.msra.mxu0 %v435
  %958 = vmatprep.subr.bf16.mxu0 0
  %959 = vmatpush2.bf16.msra.mxu0 0
  %960 = vmatprep.subr.bf16.mxu0 0
  %961 = vmatpush2.bf16.msra.mxu0 0
  %962 = vmatprep.subr.bf16.mxu0 0
  %963 = vmatpush2.bf16.msra.mxu0 0
  %964 = vmatprep.subr.bf16.mxu0 0
  %965 = vmatpush2.bf16.msra.mxu0 0
  %966 = vmatprep.subr.bf16.mxu0 0
  %967 = vmatpush2.bf16.msra.mxu0 0
  %968 = vmatprep.subr.bf16.mxu0 0
  %969 = vmatpush2.bf16.msra.mxu0 0
  %970 = vmatprep.subr.bf16.mxu0 0
  %971 = vmatpush2.bf16.msra.mxu0 0
  %972 = vmatprep.subr.bf16.mxu0 0
  %973 = vmatpush2.bf16.msra.mxu0 0
  %974 = vmatprep.mubr.bf16.mxu0 0
  %975 = vmatmul.mubr.bf16.gmra.mxu0 %v900
  %v976 = vpop.f32.mrf.mxu0
  %v977 = vadd.f32 %v305, %v976
  %v978 = vpop.f32.mrf.mxu0
  %v979 = vadd.f32 %v307, %v978
  %v980 = vpop.f32.mrf.mxu0
  %v981 = vpop.f32.mrf.mxu0
  %982 = vdwg.mxu0
  %v983 = vmul.f32 %v936, 0.5
  %v984 = vmul.f32 %v938, 0.5
  %v985 = vmul.f32 %v977, 0.5
  %v986 = vtanh.pop %v983
  %v987 = vtanh.pop %v984
  %v988 = vtanh.pop %v985
  %v989 = vadd.f32 %v986, 1.0
  %v990 = vadd.f32 %v987, 1.0
  %v991 = vadd.f32 %v988, 1.0
  %v992 = vmul.f32 %v989, 0.5
  %v993 = vmul.f32 %v990, 0.5
  %v994 = vmul.f32 %v991, 0.5
  %v995 = vtanh.pop %v979
  %v996 = vmul.f32 %v993, %v897
  %v997 = vmul.f32 %v992, %v995
  %v998 = vadd.f32 %v996, %v997
  %v999 = vtanh.pop %v998
  %v1000 = vmul.f32 %v994, %v999
  %v1001 = vpack.c.bf16 %v1000, %v1000
  %1002 = vmatprep.subr.bf16.mxu0 %v462
  %1003 = vmatpush1.bf16.msra.mxu0 %v461
  %1004 = vmatprep.subr.bf16.mxu0 %v458
  %1005 = vmatpush1.bf16.msra.mxu0 %v457
  %1006 = vmatprep.subr.bf16.mxu0 %v454
  %1007 = vmatpush1.bf16.msra.mxu0 %v453
  %1008 = vmatprep.subr.bf16.mxu0 %v450
  %1009 = vmatpush1.bf16.msra.mxu0 %v449
  %1010 = vmatprep.subr.bf16.mxu0 %v446
  %1011 = vmatpush1.bf16.msra.mxu0 %v445
  %1012 = vmatprep.subr.bf16.mxu0 %v442
  %1013 = vmatpush1.bf16.msra.mxu0 %v441
  %1014 = vmatprep.subr.bf16.mxu0 %v438
  %1015 = vmatpush1.bf16.msra.mxu0 %v437
  %1016 = vmatprep.subr.bf16.mxu0 %v434
  %1017 = vmatpush1.bf16.msra.mxu0 %v433
  %1018 = vmatprep.subr.bf16.mxu0 0
  %1019 = vmatpush2.bf16.msra.mxu0 0
  %1020 = vmatprep.subr.bf16.mxu0 0
  %1021 = vmatpush2.bf16.msra.mxu0 0
  %1022 = vmatprep.subr.bf16.mxu0 0
  %1023 = vmatpush2.bf16.msra.mxu0 0
  %1024 = vmatprep.subr.bf16.mxu0 0
  %1025 = vmatpush2.bf16.msra.mxu0 0
  %1026 = vmatprep.subr.bf16.mxu0 0
  %1027 = vmatpush2.bf16.msra.mxu0 0
  %1028 = vmatprep.subr.bf16.mxu0 0
  %1029 = vmatpush2.bf16.msra.mxu0 0
  %1030 = vmatprep.subr.bf16.mxu0 0
  %1031 = vmatpush2.bf16.msra.mxu0 0
  %1032 = vmatprep.subr.bf16.mxu0 0
  %1033 = vmatpush2.bf16.msra.mxu0 0
  %1034 = vmatprep.mubr.bf16.mxu0 0
  %1035 = vmatmul.mubr.bf16.gmra.mxu0 %v1001
  %v1036 = vpop.f32.mrf.mxu0
  %v1037 = vadd.f32 %v198, %v1036
  %v1038 = vpop.f32.mrf.mxu0
  %v1039 = vadd.f32 %v200, %v1038
  %v1040 = vpop.f32.mrf.mxu0
  %v1041 = vpop.f32.mrf.mxu0
  %1042 = vdwg.mxu0
  %1043 = vmatprep.subr.bf16.mxu0 %v464
  %1044 = vmatpush1.bf16.msra.mxu0 %v463
  %1045 = vmatprep.subr.bf16.mxu0 %v460
  %1046 = vmatpush1.bf16.msra.mxu0 %v459
  %1047 = vmatprep.subr.bf16.mxu0 %v456
  %1048 = vmatpush1.bf16.msra.mxu0 %v455
  %1049 = vmatprep.subr.bf16.mxu0 %v452
  %1050 = vmatpush1.bf16.msra.mxu0 %v451
  %1051 = vmatprep.subr.bf16.mxu0 %v448
  %1052 = vmatpush1.bf16.msra.mxu0 %v447
  %1053 = vmatprep.subr.bf16.mxu0 %v444
  %1054 = vmatpush1.bf16.msra.mxu0 %v443
  %1055 = vmatprep.subr.bf16.mxu0 %v440
  %1056 = vmatpush1.bf16.msra.mxu0 %v439
  %1057 = vmatprep.subr.bf16.mxu0 %v436
  %1058 = vmatpush1.bf16.msra.mxu0 %v435
  %1059 = vmatprep.subr.bf16.mxu0 0
  %1060 = vmatpush2.bf16.msra.mxu0 0
  %1061 = vmatprep.subr.bf16.mxu0 0
  %1062 = vmatpush2.bf16.msra.mxu0 0
  %1063 = vmatprep.subr.bf16.mxu0 0
  %1064 = vmatpush2.bf16.msra.mxu0 0
  %1065 = vmatprep.subr.bf16.mxu0 0
  %1066 = vmatpush2.bf16.msra.mxu0 0
  %1067 = vmatprep.subr.bf16.mxu0 0
  %1068 = vmatpush2.bf16.msra.mxu0 0
  %1069 = vmatprep.subr.bf16.mxu0 0
  %1070 = vmatpush2.bf16.msra.mxu0 0
  %1071 = vmatprep.subr.bf16.mxu0 0
  %1072 = vmatpush2.bf16.msra.mxu0 0
  %1073 = vmatprep.subr.bf16.mxu0 0
  %1074 = vmatpush2.bf16.msra.mxu0 0
  %1075 = vmatprep.mubr.bf16.mxu0 0
  %1076 = vmatmul.mubr.bf16.gmra.mxu0 %v1001
  %v1077 = vpop.f32.mrf.mxu0
  %v1078 = vadd.f32 %v311, %v1077
  %v1079 = vpop.f32.mrf.mxu0
  %v1080 = vadd.f32 %v313, %v1079
  %v1081 = vpop.f32.mrf.mxu0
  %v1082 = vpop.f32.mrf.mxu0
  %1083 = vdwg.mxu0
  %v1084 = vmul.f32 %v1037, 0.5
  %v1085 = vmul.f32 %v1039, 0.5
  %v1086 = vmul.f32 %v1078, 0.5
  %v1087 = vtanh.pop %v1084
  %v1088 = vtanh.pop %v1085
  %v1089 = vtanh.pop %v1086
  %v1090 = vadd.f32 %v1087, 1.0
  %v1091 = vadd.f32 %v1088, 1.0
  %v1092 = vadd.f32 %v1089, 1.0
  %v1093 = vmul.f32 %v1090, 0.5
  %v1094 = vmul.f32 %v1091, 0.5
  %v1095 = vmul.f32 %v1092, 0.5
  %v1096 = vtanh.pop %v1080
  %v1097 = vmul.f32 %v1094, %v998
  %v1098 = vmul.f32 %v1093, %v1096
  %v1099 = vadd.f32 %v1097, %v1098
  %v1100 = vtanh.pop %v1099
  %v1101 = vmul.f32 %v1095, %v1100
  %v1102 = vpack.c.bf16 %v1101, %v1101
  %1103 = vmatprep.subr.bf16.mxu0 %v462
  %1104 = vmatpush1.bf16.msra.mxu0 %v461
  %1105 = vmatprep.subr.bf16.mxu0 %v458
  %1106 = vmatpush1.bf16.msra.mxu0 %v457
  %1107 = vmatprep.subr.bf16.mxu0 %v454
  %1108 = vmatpush1.bf16.msra.mxu0 %v453
  %1109 = vmatprep.subr.bf16.mxu0 %v450
  %1110 = vmatpush1.bf16.msra.mxu0 %v449
  %1111 = vmatprep.subr.bf16.mxu0 %v446
  %1112 = vmatpush1.bf16.msra.mxu0 %v445
  %1113 = vmatprep.subr.bf16.mxu0 %v442
  %1114 = vmatpush1.bf16.msra.mxu0 %v441
  %1115 = vmatprep.subr.bf16.mxu0 %v438
  %1116 = vmatpush1.bf16.msra.mxu0 %v437
  %1117 = vmatprep.subr.bf16.mxu0 %v434
  %1118 = vmatpush1.bf16.msra.mxu0 %v433
  %1119 = vmatprep.subr.bf16.mxu0 0
  %1120 = vmatpush2.bf16.msra.mxu0 0
  %1121 = vmatprep.subr.bf16.mxu0 0
  %1122 = vmatpush2.bf16.msra.mxu0 0
  %1123 = vmatprep.subr.bf16.mxu0 0
  %1124 = vmatpush2.bf16.msra.mxu0 0
  %1125 = vmatprep.subr.bf16.mxu0 0
  %1126 = vmatpush2.bf16.msra.mxu0 0
  %1127 = vmatprep.subr.bf16.mxu0 0
  %1128 = vmatpush2.bf16.msra.mxu0 0
  %1129 = vmatprep.subr.bf16.mxu0 0
  %1130 = vmatpush2.bf16.msra.mxu0 0
  %1131 = vmatprep.subr.bf16.mxu0 0
  %1132 = vmatpush2.bf16.msra.mxu0 0
  %1133 = vmatprep.subr.bf16.mxu0 0
  %1134 = vmatpush2.bf16.msra.mxu0 0
  %1135 = vmatprep.mubr.bf16.mxu0 0
  %1136 = vmatmul.mubr.bf16.gmra.mxu0 %v1102
  %v1137 = vpop.f32.mrf.mxu0
  %v1138 = vadd.f32 %v204, %v1137
  %v1139 = vpop.f32.mrf.mxu0
  %v1140 = vadd.f32 %v206, %v1139
  %v1141 = vpop.f32.mrf.mxu0
  %v1142 = vpop.f32.mrf.mxu0
  %1143 = vdwg.mxu0
  %1144 = vmatprep.subr.bf16.mxu0 %v464
  %1145 = vmatpush1.bf16.msra.mxu0 %v463
  %1146 = vmatprep.subr.bf16.mxu0 %v460
  %1147 = vmatpush1.bf16.msra.mxu0 %v459
  %1148 = vmatprep.subr.bf16.mxu0 %v456
  %1149 = vmatpush1.bf16.msra.mxu0 %v455
  %1150 = vmatprep.subr.bf16.mxu0 %v452
  %1151 = vmatpush1.bf16.msra.mxu0 %v451
  %1152 = vmatprep.subr.bf16.mxu0 %v448
  %1153 = vmatpush1.bf16.msra.mxu0 %v447
  %1154 = vmatprep.subr.bf16.mxu0 %v444
  %1155 = vmatpush1.bf16.msra.mxu0 %v443
  %1156 = vmatprep.subr.bf16.mxu0 %v440
  %1157 = vmatpush1.bf16.msra.mxu0 %v439
  %1158 = vmatprep.subr.bf16.mxu0 %v436
  %1159 = vmatpush1.bf16.msra.mxu0 %v435
  %1160 = vmatprep.subr.bf16.mxu0 0
  %1161 = vmatpush2.bf16.msra.mxu0 0
  %1162 = vmatprep.subr.bf16.mxu0 0
  %1163 = vmatpush2.bf16.msra.mxu0 0
  %1164 = vmatprep.subr.bf16.mxu0 0
  %1165 = vmatpush2.bf16.msra.mxu0 0
  %1166 = vmatprep.subr.bf16.mxu0 0
  %1167 = vmatpush2.bf16.msra.mxu0 0
  %1168 = vmatprep.subr.bf16.mxu0 0
  %1169 = vmatpush2.bf16.msra.mxu0 0
  %1170 = vmatprep.subr.bf16.mxu0 0
  %1171 = vmatpush2.bf16.msra.mxu0 0
  %1172 = vmatprep.subr.bf16.mxu0 0
  %1173 = vmatpush2.bf16.msra.mxu0 0
  %1174 = vmatprep.subr.bf16.mxu0 0
  %1175 = vmatpush2.bf16.msra.mxu0 0
  %1176 = vmatprep.mubr.bf16.mxu0 0
  %1177 = vmatmul.mubr.bf16.gmra.mxu0 %v1102
  %v1178 = vpop.f32.mrf.mxu0
  %v1179 = vadd.f32 %v317, %v1178
  %v1180 = vpop.f32.mrf.mxu0
  %v1181 = vadd.f32 %v319, %v1180
  %v1182 = vpop.f32.mrf.mxu0
  %v1183 = vpop.f32.mrf.mxu0
  %1184 = vdwg.mxu0
  %v1185 = vmul.f32 %v1138, 0.5
  %v1186 = vmul.f32 %v1140, 0.5
  %v1187 = vmul.f32 %v1179, 0.5
  %v1188 = vtanh.pop %v1185
  %v1189 = vtanh.pop %v1186
  %v1190 = vtanh.pop %v1187
  %v1191 = vadd.f32 %v1188, 1.0
  %v1192 = vadd.f32 %v1189, 1.0
  %v1193 = vadd.f32 %v1190, 1.0
  %v1194 = vmul.f32 %v1191, 0.5
  %v1195 = vmul.f32 %v1192, 0.5
  %v1196 = vmul.f32 %v1193, 0.5
  %v1197 = vtanh.pop %v1181
  %v1198 = vmul.f32 %v1195, %v1099
  %v1199 = vmul.f32 %v1194, %v1197
  %v1200 = vadd.f32 %v1198, %v1199
  %v1201 = vtanh.pop %v1200
  %v1202 = vmul.f32 %v1196, %v1201
  %v1203 = vpack.c.bf16 %v1202, %v1202
  %1204 = vmatprep.subr.bf16.mxu0 %v462
  %1205 = vmatpush1.bf16.msra.mxu0 %v461
  %1206 = vmatprep.subr.bf16.mxu0 %v458
  %1207 = vmatpush1.bf16.msra.mxu0 %v457
  %1208 = vmatprep.subr.bf16.mxu0 %v454
  %1209 = vmatpush1.bf16.msra.mxu0 %v453
  %1210 = vmatprep.subr.bf16.mxu0 %v450
  %1211 = vmatpush1.bf16.msra.mxu0 %v449
  %1212 = vmatprep.subr.bf16.mxu0 %v446
  %1213 = vmatpush1.bf16.msra.mxu0 %v445
  %1214 = vmatprep.subr.bf16.mxu0 %v442
  %1215 = vmatpush1.bf16.msra.mxu0 %v441
  %1216 = vmatprep.subr.bf16.mxu0 %v438
  %1217 = vmatpush1.bf16.msra.mxu0 %v437
  %1218 = vmatprep.subr.bf16.mxu0 %v434
  %1219 = vmatpush1.bf16.msra.mxu0 %v433
  %1220 = vmatprep.subr.bf16.mxu0 0
  %1221 = vmatpush2.bf16.msra.mxu0 0
  %1222 = vmatprep.subr.bf16.mxu0 0
  %1223 = vmatpush2.bf16.msra.mxu0 0
  %1224 = vmatprep.subr.bf16.mxu0 0
  %1225 = vmatpush2.bf16.msra.mxu0 0
  %1226 = vmatprep.subr.bf16.mxu0 0
  %1227 = vmatpush2.bf16.msra.mxu0 0
  %1228 = vmatprep.subr.bf16.mxu0 0
  %1229 = vmatpush2.bf16.msra.mxu0 0
  %1230 = vmatprep.subr.bf16.mxu0 0
  %1231 = vmatpush2.bf16.msra.mxu0 0
  %1232 = vmatprep.subr.bf16.mxu0 0
  %1233 = vmatpush2.bf16.msra.mxu0 0
  %1234 = vmatprep.subr.bf16.mxu0 0
  %1235 = vmatpush2.bf16.msra.mxu0 0
  %1236 = vmatprep.mubr.bf16.mxu0 0
  %1237 = vmatmul.mubr.bf16.gmra.mxu0 %v1203
  %v1238 = vpop.f32.mrf.mxu0
  %v1239 = vadd.f32 %v204, %v1238
  %v1240 = vpop.f32.mrf.mxu0
  %v1241 = vadd.f32 %v206, %v1240
  %v1242 = vpop.f32.mrf.mxu0
  %v1243 = vpop.f32.mrf.mxu0
  %1244 = vdwg.mxu0
  %1245 = vmatprep.subr.bf16.mxu0 %v464
  %1246 = vmatpush1.bf16.msra.mxu0 %v463
  %1247 = vmatprep.subr.bf16.mxu0 %v460
  %1248 = vmatpush1.bf16.msra.mxu0 %v459
  %1249 = vmatprep.subr.bf16.mxu0 %v456
  %1250 = vmatpush1.bf16.msra.mxu0 %v455
  %1251 = vmatprep.subr.bf16.mxu0 %v452
  %1252 = vmatpush1.bf16.msra.mxu0 %v451
  %1253 = vmatprep.subr.bf16.mxu0 %v448
  %1254 = vmatpush1.bf16.msra.mxu0 %v447
  %1255 = vmatprep.subr.bf16.mxu0 %v444
  %1256 = vmatpush1.bf16.msra.mxu0 %v443
  %1257 = vmatprep.subr.bf16.mxu0 %v440
  %1258 = vmatpush1.bf16.msra.mxu0 %v439
  %1259 = vmatprep.subr.bf16.mxu0 %v436
  %1260 = vmatpush1.bf16.msra.mxu0 %v435
  %1261 = vmatprep.subr.bf16.mxu0 0
  %1262 = vmatpush2.bf16.msra.mxu0 0
  %1263 = vmatprep.subr.bf16.mxu0 0
  %1264 = vmatpush2.bf16.msra.mxu0 0
  %1265 = vmatprep.subr.bf16.mxu0 0
  %1266 = vmatpush2.bf16.msra.mxu0 0
  %1267 = vmatprep.subr.bf16.mxu0 0
  %1268 = vmatpush2.bf16.msra.mxu0 0
  %1269 = vmatprep.subr.bf16.mxu0 0
  %1270 = vmatpush2.bf16.msra.mxu0 0
  %1271 = vmatprep.subr.bf16.mxu0 0
  %1272 = vmatpush2.bf16.msra.mxu0 0
  %1273 = vmatprep.subr.bf16.mxu0 0
  %1274 = vmatpush2.bf16.msra.mxu0 0
  %1275 = vmatprep.subr.bf16.mxu0 0
  %1276 = vmatpush2.bf16.msra.mxu0 0
  %1277 = vmatprep.mubr.bf16.mxu0 0
  %1278 = vmatmul.mubr.bf16.gmra.mxu0 %v1203
  %v1279 = vpop.f32.mrf.mxu0
  %v1280 = vadd.f32 %v317, %v1279
  %v1281 = vpop.f32.mrf.mxu0
  %v1282 = vadd.f32 %v319, %v1281
  %v1283 = vpop.f32.mrf.mxu0
  %v1284 = vpop.f32.mrf.mxu0
  %1285 = vdwg.mxu0
  %v1286 = vmul.f32 %v1239, 0.5
  %v1287 = vmul.f32 %v1241, 0.5
  %v1288 = vmul.f32 %v1280, 0.5
  %v1289 = vtanh.pop %v1286
  %v1290 = vtanh.pop %v1287
  %v1291 = vtanh.pop %v1288
  %v1292 = vadd.f32 %v1289, 1.0
  %v1293 = vadd.f32 %v1290, 1.0
  %v1294 = vadd.f32 %v1291, 1.0
  %v1295 = vmul.f32 %v1292, 0.5
  %v1296 = vmul.f32 %v1293, 0.5
  %v1297 = vmul.f32 %v1294, 0.5
  %v1298 = vtanh.pop %v1282
  %v1299 = vmul.f32 %v1296, %v1200
  %v1300 = vmul.f32 %v1295, %v1298
  %v1301 = vadd.f32 %v1299, %v1300
  %v1302 = vtanh.pop %v1301
  %v1303 = vmul.f32 %v1297, %v1302
  %v1304 = vld [vmem:[%s3] sm:$0xff]
  %v1305 = vld [vmem:[%s3 + $0x8] sm:$0xff]
  %v1306 = vld [vmem:[%s3 + $0x10] sm:$0xff]
  %v1307 = vld [vmem:[%s3 + $0x18] sm:$0xff]
  %v1308 = vld [vmem:[%s3 + $0x20] sm:$0xff]
  %v1309 = vld [vmem:[%s3 + $0x28] sm:$0xff]
  %v1310 = vld [vmem:[%s3 + $0x30] sm:$0xff]
  %v1311 = vld [vmem:[%s3 + $0x38] sm:$0xff]
  %v1312 = vld [vmem:[%s4] sm:$0x1]
  %v1314 = vlaneseq
  %v1315 = vshrl.u32 %v1314, 7
  %v1316 = vsub.s32 0, %v1315
  %v1317 = vrot.slane %v1312, %v1316
  %v1320 = vsel %vm333, %v1303, 0
  %1322 = vmatprep.subr.mxu0 0.0
  %1323 = vmatpush1.msra.mxu0 0.0
  %1324 = vmatprep.subr.mxu0 0.0
  %1325 = vmatpush1.msra.mxu0 0.0
  %1326 = vmatprep.subr.mxu0 0.0
  %1327 = vmatpush1.msra.mxu0 0.0
  %1328 = vmatprep.subr.mxu0 0.0
  %1329 = vmatpush1.msra.mxu0 0.0
  %1330 = vmatprep.subr.mxu0 0.0
  %1331 = vmatpush1.msra.mxu0 0.0
  %1332 = vmatprep.subr.mxu0 0.0
  %1333 = vmatpush1.msra.mxu0 0.0
  %1334 = vmatprep.subr.mxu0 0.0
  %1335 = vmatpush1.msra.mxu0 0.0
  %1336 = vmatprep.subr.mxu0 0.0
  %1337 = vmatpush1.msra.mxu0 0.0
  %1338 = vmatprep.subr.mxu0 0.0
  %1339 = vmatpush1.msra.mxu0 %v1311
  %1340 = vmatprep.subr.mxu0 0.0
  %1341 = vmatpush1.msra.mxu0 %v1310
  %1342 = vmatprep.subr.mxu0 0.0
  %1343 = vmatpush1.msra.mxu0 %v1309
  %1344 = vmatprep.subr.mxu0 0.0
  %1345 = vmatpush1.msra.mxu0 %v1308
  %1346 = vmatprep.subr.mxu0 0.0
  %1347 = vmatpush1.msra.mxu0 %v1307
  %1348 = vmatprep.subr.mxu0 0.0
  %1349 = vmatpush1.msra.mxu0 %v1306
  %1350 = vmatprep.subr.mxu0 0.0
  %1351 = vmatpush1.msra.mxu0 %v1305
  %1352 = vmatprep.subr.mxu0 0.0
  %1353 = vmatpush1.msra.mxu0 %v1304
  %1354 = vmatprep.subr.mxu0 0.0
  %1355 = vmatpush2.msra.mxu0 0.0
  %1356 = vmatprep.subr.mxu0 0.0
  %1357 = vmatpush2.msra.mxu0 0.0
  %1358 = vmatprep.subr.mxu0 0.0
  %1359 = vmatpush2.msra.mxu0 0.0
  %1360 = vmatprep.subr.mxu0 0.0
  %1361 = vmatpush2.msra.mxu0 0.0
  %1362 = vmatprep.subr.mxu0 0.0
  %1363 = vmatpush2.msra.mxu0 0.0
  %1364 = vmatprep.subr.mxu0 0.0
  %1365 = vmatpush2.msra.mxu0 0.0
  %1366 = vmatprep.subr.mxu0 0.0
  %1367 = vmatpush2.msra.mxu0 0.0
  %1368 = vmatprep.subr.mxu0 0.0
  %1369 = vmatpush2.msra.mxu0 0.0
  %1370 = vmatprep.subr.mxu0 0.0
  %1371 = vmatpush2.msra.mxu0 0.0
  %1372 = vmatprep.subr.mxu0 0.0
  %1373 = vmatpush2.msra.mxu0 0.0
  %1374 = vmatprep.subr.mxu0 0.0
  %1375 = vmatpush2.msra.mxu0 0.0
  %1376 = vmatprep.subr.mxu0 0.0
  %1377 = vmatpush2.msra.mxu0 0.0
  %1378 = vmatprep.subr.mxu0 0.0
  %1379 = vmatpush2.msra.mxu0 0.0
  %1380 = vmatprep.subr.mxu0 0.0
  %1381 = vmatpush2.msra.mxu0 0.0
  %1382 = vmatprep.subr.mxu0 0.0
  %1383 = vmatpush2.msra.mxu0 0.0
  %1384 = vmatprep.subr.mxu0 0.0
  %1385 = vmatpush2.msra.mxu0 0.0
  %1386 = vmatprep.mubr.f32.mxu0 0.0
  %1387 = vmatmul.mubr.f32.gmra.mxu0 %v1320
  %v1388 = vpop.f32.mrf.mxu0
  %v1389 = vadd.f32 %v1317, %v1388
  %v1390 = vpop.f32.mrf.mxu0
  %1391 = vdwg.mxu0
  %v1392 = vmax.f32 %v1389, 0.0
  %v1393 = vld [vmem:[%s5] sm:$0xff]
  %v1394 = vld [vmem:[%s5 + $0x8] sm:$0xff]
  %v1395 = vld [vmem:[%s5 + $0x10] sm:$0xff]
  %v1396 = vld [vmem:[%s5 + $0x18] sm:$0xff]
  %v1397 = vld [vmem:[%s6] sm:$0x1]
  %v1399 = vlaneseq
  %v1400 = vshrl.u32 %v1399, 7
  %v1401 = vsub.s32 0, %v1400
  %v1402 = vrot.slane %v1397, %v1401
  %vm1404 = vcmask 261120
  %v1406 = vsel %vm1404, %v1392, 0
  %1408 = vmatprep.subr.mxu0 0.0
  %1409 = vmatpush1.msra.mxu0 0.0
  %1410 = vmatprep.subr.mxu0 0.0
  %1411 = vmatpush1.msra.mxu0 0.0
  %1412 = vmatprep.subr.mxu0 0.0
  %1413 = vmatpush1.msra.mxu0 0.0
  %1414 = vmatprep.subr.mxu0 0.0
  %1415 = vmatpush1.msra.mxu0 0.0
  %1416 = vmatprep.subr.mxu0 0.0
  %1417 = vmatpush1.msra.mxu0 0.0
  %1418 = vmatprep.subr.mxu0 0.0
  %1419 = vmatpush1.msra.mxu0 0.0
  %1420 = vmatprep.subr.mxu0 0.0
  %1421 = vmatpush1.msra.mxu0 0.0
  %1422 = vmatprep.subr.mxu0 0.0
  %1423 = vmatpush1.msra.mxu0 0.0
  %1424 = vmatprep.subr.mxu0 0.0
  %1425 = vmatpush1.msra.mxu0 0.0
  %1426 = vmatprep.subr.mxu0 0.0
  %1427 = vmatpush1.msra.mxu0 0.0
  %1428 = vmatprep.subr.mxu0 0.0
  %1429 = vmatpush1.msra.mxu0 0.0
  %1430 = vmatprep.subr.mxu0 0.0
  %1431 = vmatpush1.msra.mxu0 0.0
  %1432 = vmatprep.subr.mxu0 0.0
  %1433 = vmatpush1.msra.mxu0 %v1396
  %1434 = vmatprep.subr.mxu0 0.0
  %1435 = vmatpush1.msra.mxu0 %v1395
  %1436 = vmatprep.subr.mxu0 0.0
  %1437 = vmatpush1.msra.mxu0 %v1394
  %1438 = vmatprep.subr.mxu0 0.0
  %1439 = vmatpush1.msra.mxu0 %v1393
  %1440 = vmatprep.subr.mxu0 0.0
  %1441 = vmatpush2.msra.mxu0 0.0
  %1442 = vmatprep.subr.mxu0 0.0
  %1443 = vmatpush2.msra.mxu0 0.0
  %1444 = vmatprep.subr.mxu0 0.0
  %1445 = vmatpush2.msra.mxu0 0.0
  %1446 = vmatprep.subr.mxu0 0.0
  %1447 = vmatpush2.msra.mxu0 0.0
  %1448 = vmatprep.subr.mxu0 0.0
  %1449 = vmatpush2.msra.mxu0 0.0
  %1450 = vmatprep.subr.mxu0 0.0
  %1451 = vmatpush2.msra.mxu0 0.0
  %1452 = vmatprep.subr.mxu0 0.0
  %1453 = vmatpush2.msra.mxu0 0.0
  %1454 = vmatprep.subr.mxu0 0.0
  %1455 = vmatpush2.msra.mxu0 0.0
  %1456 = vmatprep.subr.mxu0 0.0
  %1457 = vmatpush2.msra.mxu0 0.0
  %1458 = vmatprep.subr.mxu0 0.0
  %1459 = vmatpush2.msra.mxu0 0.0
  %1460 = vmatprep.subr.mxu0 0.0
  %1461 = vmatpush2.msra.mxu0 0.0
  %1462 = vmatprep.subr.mxu0 0.0
  %1463 = vmatpush2.msra.mxu0 0.0
  %1464 = vmatprep.subr.mxu0 0.0
  %1465 = vmatpush2.msra.mxu0 0.0
  %1466 = vmatprep.subr.mxu0 0.0
  %1467 = vmatpush2.msra.mxu0 0.0
  %1468 = vmatprep.subr.mxu0 0.0
  %1469 = vmatpush2.msra.mxu0 0.0
  %1470 = vmatprep.subr.mxu0 0.0
  %1471 = vmatpush2.msra.mxu0 0.0
  %1472 = vmatprep.mubr.f32.mxu0 0.0
  %1473 = vmatmul.mubr.f32.gmra.mxu0 %v1406
  %v1474 = vpop.f32.mrf.mxu0
  %v1475 = vadd.f32 %v1402, %v1474
  %v1476 = vpop.f32.mrf.mxu0
  %1477 = vdwg.mxu0
  %vm1478 = vcmask 23552
  %1479 = vst.msk [vmem:[%s7] sm:$0xff] %vm1478, %v1475
  // Predicated region
  $region30: #{lstm_predictor.1} parent=0 // pred_check
    _
  $region31: #{lstm_predictor.1} parent=0 // pred_check_branch
    %1481 = sbr.rel (0) target = $region33
  $region32: #{lstm_predictor.1} parent=0 // pred_region
    _
  $region33: #{lstm_predictor.1} parent=0 // pred_fallthru
    _
  // Predicated region
  $region34: #{lstm_predictor.1} parent=0 // pred_check
    _
  $region35: #{lstm_predictor.1} parent=0 // pred_check_branch
    %1483 = sbr.rel (0) target = $region37
  $region36: #{lstm_predictor.1} parent=0 // pred_region
    _
  $region37: #{lstm_predictor.1} parent=0 // pred_fallthru
    _

</llo_original>
